<compile_context>
chip_gen: v5e
topology: v5e:2x2
jax: 0.10.0
libtpu: 0.0.40
codegen_flags: <defaults>
</compile_context>

<pallas_src>
import jax
import jax.numpy as jnp
from jax.experimental import pallas as pl
from jax.experimental.pallas import tpu as pltpu


def _round_up(x: int, m: int) -> int:
    return ((x + m - 1) // m) * m


def gmf_kernel(uidx_ref, iidx_ref, ut_ref, it_ref, w_ref, b_ref, o_ref):
    # uidx_ref, iidx_ref: (1, bb) int32     gathered-index rows for this block
    # ut_ref:             (F_pad, NU_pad)   user table, transposed, resident
    # it_ref:             (F_pad, NI_pad)   item table, transposed, resident
    # w_ref:              (F_pad, 1)        affine_output weight (column)
    # b_ref:              (1,) f32 in SMEM  affine_output bias
    # o_ref:              (1, bb)           rating row (lane-dense)
    uidx = uidx_ref[...]                       # (1, bb) int32
    iidx = iidx_ref[...]                       # (1, bb) int32
    f_pad, nu_pad = ut_ref.shape
    ni_pad = it_ref.shape[1]
    bb = uidx.shape[-1]

    one = jnp.float32(1.0)
    zero = jnp.float32(0.0)

    # One-hot selection matrices, (rows_pad, bb).  Padded rows / padded table
    # columns are zero, so the contraction is exact.
    u_oh = jnp.where(
        jax.lax.broadcasted_iota(jnp.int32, (nu_pad, bb), 0) == uidx, one, zero)
    i_oh = jnp.where(
        jax.lax.broadcasted_iota(jnp.int32, (ni_pad, bb), 0) == iidx, one, zero)

    # Fused gather: (F_pad, rows_pad) @ (rows_pad, bb) -> (F_pad, bb).
    # HIGHEST precision keeps the f32 gather exact.
    u_emb = jnp.dot(ut_ref[...], u_oh,
                    preferred_element_type=jnp.float32,
                    precision=jax.lax.Precision.HIGHEST)
    i_emb = jnp.dot(it_ref[...], i_oh,
                    preferred_element_type=jnp.float32,
                    precision=jax.lax.Precision.HIGHEST)

    prod = u_emb * i_emb                                        # element_product
    logits = jnp.sum(prod * w_ref[...], axis=0, keepdims=True)  # (1, bb)
    logits = logits + b_ref[0]
    o_ref[...] = jax.nn.sigmoid(logits)                         # self.logistic


def gmf_forward(user_indices, item_indices, emb_user, emb_item, w, b,
                *, block_b=2048):
    B = int(user_indices.shape[0])
    num_users, F = emb_user.shape
    num_items = emb_item.shape[0]

    # Batch tiling: batch sits on the 128-lane axis inside the kernel.
    bb = _round_up(min(block_b, _round_up(B, 128)), 128)
    B_pad = _round_up(B, bb)
    nb = B_pad // bb
    pad = B_pad - B

    # Indices padded with 0 (a valid row; padded results are sliced off), laid
    # out as (nb, 1, bb) so each grid step gets a lane-dense (1, bb) row block.
    uidx = jnp.pad(user_indices.astype(jnp.int32), (0, pad)).reshape(nb, 1, bb)
    iidx = jnp.pad(item_indices.astype(jnp.int32), (0, pad)).reshape(nb, 1, bb)

    # Tables pre-transposed (tiny parameter-sized transpose, done once outside
    # the kernel) and zero-padded to aligned (F_pad, rows_pad) so the in-kernel
    # contraction dims are fully lane/sublane aligned.
    F_pad = _round_up(F, 8)
    nu_pad = _round_up(num_users, 128)
    ni_pad = _round_up(num_items, 128)
    ut = jnp.pad(emb_user.astype(jnp.float32).T,
                 ((0, F_pad - F), (0, nu_pad - num_users)))     # (F_pad, NU_pad)
    it = jnp.pad(emb_item.astype(jnp.float32).T,
                 ((0, F_pad - F), (0, ni_pad - num_items)))     # (F_pad, NI_pad)
    w_col = jnp.pad(w.astype(jnp.float32).reshape(F, 1),
                    ((0, F_pad - F), (0, 0)))                   # (F_pad, 1)
    b_s = b.astype(jnp.float32).reshape(1)                      # (1,) SMEM scalar

    out = pl.pallas_call(
        gmf_kernel,
        out_shape=jax.ShapeDtypeStruct((nb, 1, bb), jnp.float32),
        grid_spec=pltpu.PrefetchScalarGridSpec(
            num_scalar_prefetch=0,
            grid=(nb,),
            in_specs=[
                pl.BlockSpec((None, 1, bb), lambda i: (i, 0, 0)),   # user idx
                pl.BlockSpec((None, 1, bb), lambda i: (i, 0, 0)),   # item idx
                pl.BlockSpec((F_pad, nu_pad), lambda i: (0, 0)),    # user table^T
                pl.BlockSpec((F_pad, ni_pad), lambda i: (0, 0)),    # item table^T
                pl.BlockSpec((F_pad, 1), lambda i: (0, 0)),         # affine weight
                pl.BlockSpec(memory_space=pltpu.MemorySpace.SMEM),  # bias scalar
            ],
            out_specs=pl.BlockSpec((None, 1, bb), lambda i: (i, 0, 0)),
        ),
        compiler_params=pltpu.CompilerParams(
            dimension_semantics=("parallel",)),
    )(uidx, iidx, ut, it, w_col, b_s)

    return out.reshape(B_pad, 1)[:B]


if __name__ == "__main__":
    # Small, deterministic synthetic setup consistent with the module.
    num_users = 48
    num_items = 64
    factor_num = 32
    batch = 1000          # exercises padding (pads to 1024) and a 4-step grid

    key = jax.random.PRNGKey(0)
    k_u, k_i, k_w, k_b, k_ui, k_ii = jax.random.split(key, 6)

    # nn.Embedding default init: N(0, 1)
    emb_user = jax.random.normal(k_u, (num_users, factor_num), dtype=jnp.float32)
    emb_item = jax.random.normal(k_i, (num_items, factor_num), dtype=jnp.float32)

    # nn.Linear default init: U(-1/sqrt(fan_in), 1/sqrt(fan_in))
    bound = 1.0 / jnp.sqrt(jnp.float32(factor_num))
    w = jax.random.uniform(k_w, (1, factor_num), minval=-bound, maxval=bound,
                           dtype=jnp.float32)
    b = jax.random.uniform(k_b, (1,), minval=-bound, maxval=bound,
                           dtype=jnp.float32)

    user_indices = jax.random.randint(k_ui, (batch,), 0, num_users, dtype=jnp.int32)
    item_indices = jax.random.randint(k_ii, (batch,), 0, num_items, dtype=jnp.int32)

    # block_b=256 here so the small demo batch still spans 4 grid steps
    # (keeps both v7x TensorCores busy); default block_b=2048 for real batches.
    rating = gmf_forward(user_indices, item_indices, emb_user, emb_item, w, b,
                         block_b=256)
    rating = jax.block_until_ready(rating)

    # Pure-JAX reference (exact gather + f32 math).
    eu = emb_user[user_indices]
    ei = emb_item[item_indices]
    ref = jax.nn.sigmoid(
        jnp.sum(eu * ei * w.reshape(1, factor_num), axis=-1, keepdims=True) + b)

    assert rating.shape == (batch, 1)
    assert jnp.allclose(rating, ref, atol=1e-5, rtol=1e-5), \
        float(jnp.max(jnp.abs(rating - ref)))

    print("KERNEL_OK")
</pallas_src>

<mosaic_0001>
module attributes {stable_mosaic.version = 11 : i64} {
  func.func @gmf_kernel(%arg0: i32, %arg1: memref<1x1x256xi32, #tpu.memory_space<vmem>>, %arg2: memref<1x1x256xi32, #tpu.memory_space<vmem>>, %arg3: memref<32x128xf32, #tpu.memory_space<vmem>>, %arg4: memref<32x128xf32, #tpu.memory_space<vmem>>, %arg5: memref<32x1xf32, #tpu.memory_space<vmem>>, %arg6: memref<1xf32, #tpu.memory_space<smem>>, %arg7: memref<1x1x256xf32, #tpu.memory_space<vmem>>) attributes {dimension_semantics = [#tpu.dimension_semantics<parallel>], iteration_bounds = array<i64: 4>, scalar_prefetch = 0 : i64, scratch_operands = 0 : i64, tpu.core_type = #tpu.core_type<tc>, window_params = [{transform_indices = @transform_0, window_bounds = array<i64: 1, 1, 256>}, {transform_indices = @transform_1, window_bounds = array<i64: 1, 1, 256>}, {pipeline_mode = #tpu.pipeline_mode<synchronous>, transform_indices = @transform_2, window_bounds = array<i64: 32, 128>}, {pipeline_mode = #tpu.pipeline_mode<synchronous>, transform_indices = @transform_3, window_bounds = array<i64: 32, 128>}, {pipeline_mode = #tpu.pipeline_mode<synchronous>, transform_indices = @transform_4, window_bounds = array<i64: 32, 1>}, {transform_indices = @transform_5, window_bounds = array<i64: 1>}, {transform_indices = @transform_6, window_bounds = array<i64: 1, 1, 256>}]} {
    %c0 = arith.constant 0 : index
    %c0_0 = arith.constant 0 : index
    %c0_1 = arith.constant 0 : index
    %0 = vector.load %arg1[%c0, %c0_0, %c0_1] : memref<1x1x256xi32, #tpu.memory_space<vmem>>, vector<1x1x256xi32>
    %1 = vector.shape_cast %0 : vector<1x1x256xi32> to vector<1x256xi32>
    %c0_2 = arith.constant 0 : index
    %c0_3 = arith.constant 0 : index
    %c0_4 = arith.constant 0 : index
    %2 = vector.load %arg2[%c0_2, %c0_3, %c0_4] : memref<1x1x256xi32, #tpu.memory_space<vmem>>, vector<1x1x256xi32>
    %3 = vector.shape_cast %2 : vector<1x1x256xi32> to vector<1x256xi32>
    %4 = tpu.iota {dimensions = array<i32: 0>} : vector<128x256xi32>
    %5 = vector.broadcast %1 : vector<1x256xi32> to vector<128x256xi32>
    %6 = arith.cmpi eq, %4, %5 : vector<128x256xi32>
    %cst = arith.constant 1.000000e+00 : f32
    %cst_5 = arith.constant 0.000000e+00 : f32
    %7 = vector.broadcast %cst : f32 to vector<128x256xf32>
    %8 = vector.broadcast %cst_5 : f32 to vector<128x256xf32>
    %9 = arith.select %6, %7, %8 : vector<128x256xi1>, vector<128x256xf32>
    %10 = tpu.iota {dimensions = array<i32: 0>} : vector<128x256xi32>
    %11 = vector.broadcast %3 : vector<1x256xi32> to vector<128x256xi32>
    %12 = arith.cmpi eq, %10, %11 : vector<128x256xi32>
    %cst_6 = arith.constant 1.000000e+00 : f32
    %cst_7 = arith.constant 0.000000e+00 : f32
    %13 = vector.broadcast %cst_6 : f32 to vector<128x256xf32>
    %14 = vector.broadcast %cst_7 : f32 to vector<128x256xf32>
    %15 = arith.select %12, %13, %14 : vector<128x256xi1>, vector<128x256xf32>
    %c0_8 = arith.constant 0 : index
    %c0_9 = arith.constant 0 : index
    %16 = vector.load %arg3[%c0_8, %c0_9] : memref<32x128xf32, #tpu.memory_space<vmem>>, vector<32x128xf32>
    %cst_10 = arith.constant dense<0.000000e+00> : vector<32x256xf32>
    %17 = tpu.matmul %16, %9, %cst_10 {dimension_numbers = #tpu.dot_dimension_numbers<[1], [0], [0], [1], [0, 0, 1, 1], [], []>, precision = #tpu.contract_precision<fp32>} : vector<32x128xf32>, vector<128x256xf32>, vector<32x256xf32> -> vector<32x256xf32>
    %c0_11 = arith.constant 0 : index
    %c0_12 = arith.constant 0 : index
    %18 = vector.load %arg4[%c0_11, %c0_12] : memref<32x128xf32, #tpu.memory_space<vmem>>, vector<32x128xf32>
    %cst_13 = arith.constant dense<0.000000e+00> : vector<32x256xf32>
    %19 = tpu.matmul %18, %15, %cst_13 {dimension_numbers = #tpu.dot_dimension_numbers<[1], [0], [0], [1], [0, 0, 1, 1], [], []>, precision = #tpu.contract_precision<fp32>} : vector<32x128xf32>, vector<128x256xf32>, vector<32x256xf32> -> vector<32x256xf32>
    %20 = arith.mulf %17, %19 : vector<32x256xf32>
    %c0_14 = arith.constant 0 : index
    %c0_15 = arith.constant 0 : index
    %21 = vector.load %arg5[%c0_14, %c0_15] : memref<32x1xf32, #tpu.memory_space<vmem>>, vector<32x1xf32>
    %22 = vector.broadcast %21 : vector<32x1xf32> to vector<32x256xf32>
    %23 = arith.mulf %20, %22 : vector<32x256xf32>
    %cst_16 = arith.constant dense<0.000000e+00> : vector<256xf32>
    %24 = vector.multi_reduction <add>, %23, %cst_16 [0] : vector<32x256xf32> to vector<256xf32>
    %25 = vector.shape_cast %24 : vector<256xf32> to vector<1x256xf32>
    %c0_17 = arith.constant 0 : index
    %26 = memref.load %arg6[%c0_17] : memref<1xf32, #tpu.memory_space<smem>>
    %27 = vector.broadcast %26 : f32 to vector<1x256xf32>
    %28 = arith.addf %25, %27 : vector<1x256xf32>
    %29 = arith.negf %28 : vector<1x256xf32>
    %30 = math.exp %29 : vector<1x256xf32>
    %cst_18 = arith.constant 1.000000e+00 : f32
    %31 = vector.broadcast %cst_18 : f32 to vector<1x256xf32>
    %32 = arith.addf %31, %30 : vector<1x256xf32>
    %33 = arith.divf %31, %32 : vector<1x256xf32>
    %c0_19 = arith.constant 0 : index
    %c0_20 = arith.constant 0 : index
    %c0_21 = arith.constant 0 : index
    %34 = vector.load %arg7[%c0_19, %c0_20, %c0_21] : memref<1x1x256xf32, #tpu.memory_space<vmem>>, vector<1x1x256xf32>
    %35 = vector.shape_cast %34 : vector<1x1x256xf32> to vector<1x256xf32>
    %36 = vector.shape_cast %33 : vector<1x256xf32> to vector<1x1x256xf32>
    tpu.vector_store %arg7[%c0_19, %c0_20, %c0_21], %36 {strides = array<i32>} : memref<1x1x256xf32, #tpu.memory_space<vmem>>, vector<1x1x256xf32>,
    return
  }
  func.func @transform_0(%arg0: i32) -> (i32, i32, i32) {
    %c0_i32 = arith.constant 0 : i32
    %c0_i32_0 = arith.constant 0 : i32
    %c0_i32_1 = arith.constant 0 : i32
    return %arg0, %c0_i32, %c0_i32_0 : i32, i32, i32
  }
  func.func @transform_1(%arg0: i32) -> (i32, i32, i32) {
    %c0_i32 = arith.constant 0 : i32
    %c0_i32_0 = arith.constant 0 : i32
    %c0_i32_1 = arith.constant 0 : i32
    return %arg0, %c0_i32, %c0_i32_0 : i32, i32, i32
  }
  func.func @transform_2(%arg0: i32) -> (i32, i32) {
    %c0_i32 = arith.constant 0 : i32
    %c0_i32_0 = arith.constant 0 : i32
    %c0_i32_1 = arith.constant 0 : i32
    return %c0_i32, %c0_i32_0 : i32, i32
  }
  func.func @transform_3(%arg0: i32) -> (i32, i32) {
    %c0_i32 = arith.constant 0 : i32
    %c0_i32_0 = arith.constant 0 : i32
    %c0_i32_1 = arith.constant 0 : i32
    return %c0_i32, %c0_i32_0 : i32, i32
  }
  func.func @transform_4(%arg0: i32) -> (i32, i32) {
    %c0_i32 = arith.constant 0 : i32
    %c0_i32_0 = arith.constant 0 : i32
    %c0_i32_1 = arith.constant 0 : i32
    return %c0_i32, %c0_i32_0 : i32, i32
  }
  func.func @transform_5(%arg0: i32) -> i32 {
    %c0_i32 = arith.constant 0 : i32
    %c0_i32_0 = arith.constant 0 : i32
    return %c0_i32 : i32
  }
  func.func @transform_6(%arg0: i32) -> (i32, i32, i32) {
    %c0_i32 = arith.constant 0 : i32
    %c0_i32_0 = arith.constant 0 : i32
    %c0_i32_1 = arith.constant 0 : i32
    return %arg0, %c0_i32, %c0_i32_0 : i32, i32, i32
  }
}

</mosaic_0001>

<llo_original>
// kernel: tpu_custom_call.1
$region0: #{tpu_custom_call.1}
  #allocation0 [shape = 'u32[]', space=smem, size = 0x4, offset = 0x4, fixed_abs, tag = 'smem constant byte address 0x4 - core index']
  #allocation1 [shape = 'u32[72,128]{1,0:T(1,128)}', space=vmem, size = 0x9000, scoped, tag = 'internal scratch']
  #allocation2 [shape = 'f32[1]{0:T(128)S(6)}', space=smem, size = 0x200, scoped, tag = 'scoped memory for tpu_custom_call.1']
  %s0 = inlined_call_operand.hbm [shape: s32[4,1,256], index: 0, kind: input, shape index: {}]
  %s1 = inlined_call_operand.hbm [shape: s32[4,1,256], index: 1, kind: input, shape index: {}]
  %s2 = inlined_call_operand.vmem [shape: f32[32,128], index: 2, kind: input, shape index: {}]
  %s3 = inlined_call_operand.hbm [shape: f32[32,128], index: 3, kind: input, shape index: {}]
  %s4 = inlined_call_operand.vmem [shape: f32[32,1], index: 4, kind: input, shape index: {}]
  %s5 = inlined_call_operand.<no memory space> [shape: f32[1], index: 5, kind: input, shape index: {}]
  %s6 = inlined_call_operand.hbm [shape: f32[4,1,256], index: 6, kind: output, shape index: {}]
  %s7 = sld [smem:[#allocation0]]
  $region69: #{tpu_custom_call.1} parent=0
    _
  %s9 = ssub.s32 1, %s7
  %s10 = scalar_select 0, %s9, %s7
  %11 = sst [smem:[#allocation2]] %s5
  $region1: #{tpu_custom_call.1} parent=0
    #allocation3 [shape = 'u8[2048]{0}', space=vmem, size = 0x800, scoped, tag = 'input window, operand 0']
    #allocation4 [shape = 's32[2]{0}', space=sflag, size = 0x8, scoped, tag = 'scoped memory for tpu_custom_call.1']
    #allocation5 [shape = 's32[2]{0}', space=sflag, size = 0x8, scoped, tag = 'scoped memory for tpu_custom_call.1']
    #allocation6 [shape = 'u8[2048]{0}', space=vmem, size = 0x800, scoped, tag = 'input window, operand 1']
    #allocation7 [shape = 's32[2]{0}', space=sflag, size = 0x8, scoped, tag = 'scoped memory for tpu_custom_call.1']
    #allocation8 [shape = 'u8[16384]{0}', space=vmem, size = 0x4000, scoped, tag = 'input window, operand 3, single buffered']
    #allocation9 [shape = 'u8[2048]{0}', space=vmem, size = 0x800, scoped, tag = 'output window, operand 0']
    %12 = vsyncpa [#allocation4], 0
    %s13 = scalar_lea.sflag [#allocation4], 1
    %14 = vsyncpa %s13, 0
    %15 = vsyncpa [#allocation7], 0
    %s16 = scalar_lea.sflag [#allocation7], 1
    %17 = vsyncpa %s16, 0
    %18 = vsyncpa [#allocation5], 0
    %s19 = scalar_lea.sflag [#allocation5], 1
    %20 = vsyncpa %s19, 0
    loop: start=0, step=1, limit=6
    $region2: #{tpu_custom_call.1} parent=1 // loop_pre_header
      _
    $region3: #{tpu_custom_call.1} parent=1 // loop_header
      %s22 = sphi 0, %s26
      %p23 = scmp.ge.s32.totalorder %s22, 6
      %s32 = sphi 0, %s34
      %s35 = sphi 0, %s32
      %s36 = sphi 0, %s35
      %s52 = sphi 0, %s36
      %s58 = sphi 0, %s60
      %s61 = sphi 0, %s58
      %s62 = sphi 0, %s61
      %s78 = sphi 0, %s62
      %s82 = sphi 0, %s82
      %s84 = sphi 0, %s82
      %s85 = sphi 0, %s84
      %s99 = sphi 0, %s85
      %s103 = sphi 0, %s103
      %s105 = sphi 0, %s103
      %s106 = sphi 0, %s105
      %s120 = sphi 0, %s106
      %s124 = sphi 0, %s124
      %s126 = sphi 0, %s124
      %s127 = sphi 0, %s126
      %s141 = sphi 0, %s127
      %s145 = sphi 0, %s145
      %s147 = sphi 0, %s145
      %s148 = sphi 0, %s147
      %s162 = sphi 0, %s148
      %s168 = sphi 0, %s170
      %s171 = sphi 0, %s168
      %s172 = sphi 0, %s171
      %s188 = sphi 0, %s172
    $region4: #{tpu_custom_call.1} parent=1 // loop_header_branch
      %25 = sbr.rel (%p23) target = $region8
    $region5: #{tpu_custom_call.1} parent=1 // loop_body
      %s27 = ssub.s32 %s22, 1
      %s28 = ssub.s32 %s22, 2
      %s29 = sadd.s32 %s22, 1
      %s30 = ssub.s32 %s22, %s29
      %p31 = scmp.eq.s32.totalorder %s30, 0
      %s33 = sadd.s32 %s32, 1
      %s34 = scalar_select %p31, %s32, %s33
      %p37 = pneg %p31
      %p38 = scmp.eq.s32.totalorder %s22, 3
      %p39 = por %p37, %p38
      %p40 = scmp.ne.s32.totalorder %s32, %s35
      %p41 = scmp.eq.s32.totalorder %s22, 0
      %p42 = por %p40, %p41
      %p43 = scmp.ne.s32.totalorder %s32, %s35
      %p44 = scmp.eq.s32.totalorder %s27, 3
      %p45 = por %p43, %p44
      %p46 = scmp.ne.s32.totalorder %s35, %s36
      %p47 = scmp.eq.s32.totalorder %s27, 0
      %p48 = por %p46, %p47
      %p49 = scmp.ne.s32.totalorder %s35, %s36
      %p50 = scmp.eq.s32.totalorder %s28, 3
      %p51 = por %p49, %p50
      %p53 = scmp.ne.s32.totalorder %s36, %s52
      %p54 = scmp.eq.s32.totalorder %s28, 0
      %p55 = por %p53, %p54
      %s56 = ssub.s32 %s22, %s29
      %p57 = scmp.eq.s32.totalorder %s56, 0
      %s59 = sadd.s32 %s58, 1
      %s60 = scalar_select %p57, %s58, %s59
      %p63 = pneg %p57
      %p64 = scmp.eq.s32.totalorder %s22, 3
      %p65 = por %p63, %p64
      %p66 = scmp.ne.s32.totalorder %s58, %s61
      %p67 = scmp.eq.s32.totalorder %s22, 0
      %p68 = por %p66, %p67
      %p69 = scmp.ne.s32.totalorder %s58, %s61
      %p70 = scmp.eq.s32.totalorder %s27, 3
      %p71 = por %p69, %p70
      %p72 = scmp.ne.s32.totalorder %s61, %s62
      %p73 = scmp.eq.s32.totalorder %s27, 0
      %p74 = por %p72, %p73
      %p75 = scmp.ne.s32.totalorder %s61, %s62
      %p76 = scmp.eq.s32.totalorder %s28, 3
      %p77 = por %p75, %p76
      %p79 = scmp.ne.s32.totalorder %s62, %s78
      %p80 = scmp.eq.s32.totalorder %s28, 0
      %p81 = por %p79, %p80
      %s83 = sadd.s32 %s82, 1
      %p86 = scmp.eq.s32.totalorder %s22, 3
      %p87 = scmp.ne.s32.totalorder %s82, %s84
      %p88 = scmp.eq.s32.totalorder %s22, 0
      %p89 = por %p87, %p88
      %p90 = scmp.ne.s32.totalorder %s82, %s84
      %p91 = scmp.eq.s32.totalorder %s27, 3
      %p92 = por %p90, %p91
      %p93 = scmp.ne.s32.totalorder %s84, %s85
      %p94 = scmp.eq.s32.totalorder %s27, 0
      %p95 = por %p93, %p94
      %p96 = scmp.ne.s32.totalorder %s84, %s85
      %p97 = scmp.eq.s32.totalorder %s28, 3
      %p98 = por %p96, %p97
      %p100 = scmp.ne.s32.totalorder %s85, %s99
      %p101 = scmp.eq.s32.totalorder %s28, 0
      %p102 = por %p100, %p101
      %s104 = sadd.s32 %s103, 1
      %p107 = scmp.eq.s32.totalorder %s22, 3
      %p108 = scmp.ne.s32.totalorder %s103, %s105
      %p109 = scmp.eq.s32.totalorder %s22, 0
      %p110 = por %p108, %p109
      %p111 = scmp.ne.s32.totalorder %s103, %s105
      %p112 = scmp.eq.s32.totalorder %s27, 3
      %p113 = por %p111, %p112
      %p114 = scmp.ne.s32.totalorder %s105, %s106
      %p115 = scmp.eq.s32.totalorder %s27, 0
      %p116 = por %p114, %p115
      %p117 = scmp.ne.s32.totalorder %s105, %s106
      %p118 = scmp.eq.s32.totalorder %s28, 3
      %p119 = por %p117, %p118
      %p121 = scmp.ne.s32.totalorder %s106, %s120
      %p122 = scmp.eq.s32.totalorder %s28, 0
      %p123 = por %p121, %p122
      %s125 = sadd.s32 %s124, 1
      %p128 = scmp.eq.s32.totalorder %s22, 3
      %p129 = scmp.ne.s32.totalorder %s124, %s126
      %p130 = scmp.eq.s32.totalorder %s22, 0
      %p131 = por %p129, %p130
      %p132 = scmp.ne.s32.totalorder %s124, %s126
      %p133 = scmp.eq.s32.totalorder %s27, 3
      %p134 = por %p132, %p133
      %p135 = scmp.ne.s32.totalorder %s126, %s127
      %p136 = scmp.eq.s32.totalorder %s27, 0
      %p137 = por %p135, %p136
      %p138 = scmp.ne.s32.totalorder %s126, %s127
      %p139 = scmp.eq.s32.totalorder %s28, 3
      %p140 = por %p138, %p139
      %p142 = scmp.ne.s32.totalorder %s127, %s141
      %p143 = scmp.eq.s32.totalorder %s28, 0
      %p144 = por %p142, %p143
      %s146 = sadd.s32 %s145, 1
      %p149 = scmp.eq.s32.totalorder %s22, 3
      %p150 = scmp.ne.s32.totalorder %s145, %s147
      %p151 = scmp.eq.s32.totalorder %s22, 0
      %p152 = por %p150, %p151
      %p153 = scmp.ne.s32.totalorder %s145, %s147
      %p154 = scmp.eq.s32.totalorder %s27, 3
      %p155 = por %p153, %p154
      %p156 = scmp.ne.s32.totalorder %s147, %s148
      %p157 = scmp.eq.s32.totalorder %s27, 0
      %p158 = por %p156, %p157
      %p159 = scmp.ne.s32.totalorder %s147, %s148
      %p160 = scmp.eq.s32.totalorder %s28, 3
      %p161 = por %p159, %p160
      %p163 = scmp.ne.s32.totalorder %s148, %s162
      %p164 = scmp.eq.s32.totalorder %s28, 0
      %p165 = por %p163, %p164
      %s166 = ssub.s32 %s22, %s29
      %p167 = scmp.eq.s32.totalorder %s166, 0
      %s169 = sadd.s32 %s168, 1
      %s170 = scalar_select %p167, %s168, %s169
      %p173 = pneg %p167
      %p174 = scmp.eq.s32.totalorder %s22, 3
      %p175 = por %p173, %p174
      %p176 = scmp.ne.s32.totalorder %s168, %s171
      %p177 = scmp.eq.s32.totalorder %s22, 0
      %p178 = por %p176, %p177
      %p179 = scmp.ne.s32.totalorder %s168, %s171
      %p180 = scmp.eq.s32.totalorder %s27, 3
      %p181 = por %p179, %p180
      %p182 = scmp.ne.s32.totalorder %s171, %s172
      %p183 = scmp.eq.s32.totalorder %s27, 0
      %p184 = por %p182, %p183
      %p185 = scmp.ne.s32.totalorder %s171, %s172
      %p186 = scmp.eq.s32.totalorder %s28, 3
      %p187 = por %p185, %p186
      %p189 = scmp.ne.s32.totalorder %s172, %s188
      %p190 = scmp.eq.s32.totalorder %s28, 0
      %p191 = por %p189, %p190
      %p192 = scmp.le.s32.totalorder 1, %s22
      %p193 = scmp.lt.s32.totalorder %s22, 5
      %p194 = pnand %p192, %p193
      %p195 = pneg %p194
      // Predicated region
      $region9: #{tpu_custom_call.1} parent=5 // pred_check
        _
      $region10: #{tpu_custom_call.1} parent=5 // pred_check_branch
        %197 = sbr.rel (%p194) target = $region12
      $region11: #{tpu_custom_call.1} parent=5 // pred_region
        %s198 = ssub.s32 %s22, 1
        // Predicated region
        $region13: #{tpu_custom_call.1} parent=11 // pred_check
          %p199 = pneg %p95
        $region14: #{tpu_custom_call.1} parent=11 // pred_check_branch
          %201 = sbr.rel (%p199) target = $region16
        $region15: #{tpu_custom_call.1} parent=11 // pred_region
          _
        $region16: #{tpu_custom_call.1} parent=11 // pred_fallthru
          _
        // Predicated region
        $region17: #{tpu_custom_call.1} parent=11 // pred_check
          %p202 = pneg %p116
        $region18: #{tpu_custom_call.1} parent=11 // pred_check_branch
          %204 = sbr.rel (%p202) target = $region20
        $region19: #{tpu_custom_call.1} parent=11 // pred_region
          %206 = vsyncadd [#allocation7], 0
          %s207 = sshll.u32 %s3, 4
          %s208 = int_to_ptr.hbm [resolvable:$true] %s207
          %s209 = sshll.u32 [#allocation8], 4
          %s210 = int_to_ptr.vmem [resolvable:$true] %s209
          %215 = dma.hbm_to_vmem [thread:$0]  %s208, 512, %s210, [#allocation7], 128, 128, 8
        $region20: #{tpu_custom_call.1} parent=11 // pred_fallthru
          _
        // Predicated region
        $region21: #{tpu_custom_call.1} parent=11 // pred_check
          %p216 = pneg %p137
        $region22: #{tpu_custom_call.1} parent=11 // pred_check_branch
          %218 = sbr.rel (%p216) target = $region24
        $region23: #{tpu_custom_call.1} parent=11 // pred_region
          _
        $region24: #{tpu_custom_call.1} parent=11 // pred_fallthru
          _
        // Predicated region
        $region25: #{tpu_custom_call.1} parent=11 // pred_check
          %p219 = pneg %p158
        $region26: #{tpu_custom_call.1} parent=11 // pred_check_branch
          %221 = sbr.rel (%p219) target = $region28
        $region27: #{tpu_custom_call.1} parent=11 // pred_region
          _
        $region28: #{tpu_custom_call.1} parent=11 // pred_fallthru
          _
      $region12: #{tpu_custom_call.1} parent=5 // pred_fallthru
        _
      %p222 = scmp.lt.s32.totalorder %s22, 4
      // Predicated region
      $region29: #{tpu_custom_call.1} parent=5 // pred_check
        %p223 = pneg %p222
      $region30: #{tpu_custom_call.1} parent=5 // pred_check_branch
        %225 = sbr.rel (%p223) target = $region32
      $region31: #{tpu_custom_call.1} parent=5 // pred_region
        // Predicated region
        $region33: #{tpu_custom_call.1} parent=31 // pred_check
          %p226 = pneg %p42
        $region34: #{tpu_custom_call.1} parent=31 // pred_check_branch
          %228 = sbr.rel (%p226) target = $region36
        $region35: #{tpu_custom_call.1} parent=31 // pred_region
          %s229 = sand.u32 %s32, 1
          %s230 = scalar_lea.sflag [#allocation4], %s229
          %s231 = sand.u32 %s32, 1
          %s232 = smul.addr %s231, 2
          %s233 = scalar_lea.vmem [#allocation3], %s232
          %235 = vsyncadd %s230, 0
          %s236 = smul.addr %s22, 2
          %s237 = scalar_lea.hbm %s0, %s236
          %s239 = sshll.u32 %s237, 4
          %s240 = int_to_ptr.hbm [resolvable:$true] %s239
          %s241 = sshll.u32 %s233, 4
          %s242 = int_to_ptr.vmem [resolvable:$true] %s241
          %244 = dma.hbm_to_vmem [thread:$0]  %s240, 32, %s242, %s230
        $region36: #{tpu_custom_call.1} parent=31 // pred_fallthru
          _
        // Predicated region
        $region37: #{tpu_custom_call.1} parent=31 // pred_check
          %p245 = pneg %p68
        $region38: #{tpu_custom_call.1} parent=31 // pred_check_branch
          %247 = sbr.rel (%p245) target = $region40
        $region39: #{tpu_custom_call.1} parent=31 // pred_region
          %s248 = sand.u32 %s22, 1
          %s249 = scalar_lea.sflag [#allocation7], %s248
          %s250 = sand.u32 %s58, 1
          %s251 = smul.addr %s250, 2
          %s252 = scalar_lea.vmem [#allocation6], %s251
          %254 = vsyncadd %s249, 0
          %s255 = smul.addr %s22, 2
          %s256 = scalar_lea.hbm %s1, %s255
          %s258 = sshll.u32 %s256, 4
          %s259 = int_to_ptr.hbm [resolvable:$true] %s258
          %s260 = sshll.u32 %s252, 4
          %s261 = int_to_ptr.vmem [resolvable:$true] %s260
          %263 = dma.hbm_to_vmem [thread:$0]  %s259, 32, %s261, %s249
        $region40: #{tpu_custom_call.1} parent=31 // pred_fallthru
          _
      $region32: #{tpu_custom_call.1} parent=5 // pred_fallthru
        _
      %p264 = scmp.le.s32.totalorder 1, %s22
      %p265 = scmp.lt.s32.totalorder %s22, 5
      %p266 = pnand %p264, %p265
      %p267 = pneg %p266
      // Predicated region
      $region41: #{tpu_custom_call.1} parent=5 // pred_check
        _
      $region42: #{tpu_custom_call.1} parent=5 // pred_check_branch
        %269 = sbr.rel (%p266) target = $region44
      $region43: #{tpu_custom_call.1} parent=5 // pred_region
        %s270 = ssub.s32 %s22, 1
        %s271 = sand.u32 %s35, 1
        %s272 = scalar_lea.sflag [#allocation4], %s271
        %s273 = sand.u32 %s35, 1
        %s274 = smul.addr %s273, 2
        %s275 = scalar_lea.vmem [#allocation3], %s274
        // Predicated region
        $region45: #{tpu_custom_call.1} parent=43 // pred_check
          %p276 = pneg %p48
        $region46: #{tpu_custom_call.1} parent=43 // pred_check_branch
          %278 = sbr.rel (%p276) target = $region48
        $region47: #{tpu_custom_call.1} parent=43 // pred_region
          %280 = dma.done %s272, 32
        $region48: #{tpu_custom_call.1} parent=43 // pred_fallthru
          _
        %s281 = sand.u32 %s27, 1
        %s282 = scalar_lea.sflag [#allocation7], %s281
        %s283 = sand.u32 %s61, 1
        %s284 = smul.addr %s283, 2
        %s285 = scalar_lea.vmem [#allocation6], %s284
        // Predicated region
        $region49: #{tpu_custom_call.1} parent=43 // pred_check
          %p286 = pneg %p74
        $region50: #{tpu_custom_call.1} parent=43 // pred_check_branch
          %288 = sbr.rel (%p286) target = $region52
        $region51: #{tpu_custom_call.1} parent=43 // pred_region
          %290 = dma.done %s282, 32
        $region52: #{tpu_custom_call.1} parent=43 // pred_fallthru
          _
        // Predicated region
        $region53: #{tpu_custom_call.1} parent=43 // pred_check
          %p291 = pneg %p116
        $region54: #{tpu_custom_call.1} parent=43 // pred_check_branch
          %293 = sbr.rel (%p291) target = $region56
        $region55: #{tpu_custom_call.1} parent=43 // pred_region
          %295 = dma.done [#allocation7], 512
        $region56: #{tpu_custom_call.1} parent=43 // pred_fallthru
          _
        %s296 = sand.u32 %s35, 1
        %s297 = scalar_lea.sflag [#allocation4], %s296
        %s298 = sand.u32 %s35, 1
        %s299 = smul.addr %s298, 2
        %s300 = scalar_lea.vmem [#allocation3], %s299
        %p301 = pneg %p48
        %p302 = pneg %p45
        %s303 = sand.u32 %s27, 1
        %s304 = scalar_lea.sflag [#allocation7], %s303
        %s305 = sand.u32 %s61, 1
        %s306 = smul.addr %s305, 2
        %s307 = scalar_lea.vmem [#allocation6], %s306
        %p308 = pneg %p74
        %p309 = pneg %p71
        %p310 = pneg %p95
        %p311 = pneg %p92
        %p312 = pneg %p116
        %p313 = pneg %p113
        %p314 = pneg %p137
        %p315 = pneg %p134
        %p316 = pneg %p158
        %p317 = pneg %p155
        %p318 = pneg %p184
        %p319 = pneg %p181
        %s320 = sand.u32 %s171, 1
        %s321 = scalar_lea.sflag [#allocation5], %s320
        %s322 = sand.u32 %s171, 1
        %s323 = smul.addr %s322, 2
        %s324 = scalar_lea.vmem [#allocation9], %s323
        %v325 = vld [vmem:[%s275] sm:$0x3]
        %v326 = vld [vmem:[%s285] sm:$0x3]
        %v327 = vlaneseq
        %v328 = vshrl.u32 %v327, 7
        %v329 = vadd.s32 %v328, 8
        %v330 = vadd.s32 %v328, 16
        %v331 = vadd.s32 %v328, 24
        %v332 = vadd.s32 %v328, 32
        %v333 = vadd.s32 %v328, 40
        %v334 = vadd.s32 %v328, 48
        %v335 = vadd.s32 %v328, 56
        %v336 = vadd.s32 %v328, 64
        %v337 = vadd.s32 %v328, 72
        %v338 = vadd.s32 %v328, 80
        %v339 = vadd.s32 %v328, 88
        %v340 = vadd.s32 %v328, 96
        %v341 = vadd.s32 %v328, 104
        %v342 = vadd.s32 %v328, 112
        %v343 = vadd.s32 %v328, 120
        %v344 = vperm.slane %v325, 0
        %v345 = vperm.slane %v325, 1
        %vm346 = vcmp.eq.s32.totalorder %v328, %v344
        %vm347 = vcmp.eq.s32.totalorder %v328, %v345
        %vm348 = vcmp.eq.s32.totalorder %v329, %v344
        %vm349 = vcmp.eq.s32.totalorder %v329, %v345
        %vm350 = vcmp.eq.s32.totalorder %v330, %v344
        %vm351 = vcmp.eq.s32.totalorder %v330, %v345
        %vm352 = vcmp.eq.s32.totalorder %v331, %v344
        %vm353 = vcmp.eq.s32.totalorder %v331, %v345
        %vm354 = vcmp.eq.s32.totalorder %v332, %v344
        %vm355 = vcmp.eq.s32.totalorder %v332, %v345
        %vm356 = vcmp.eq.s32.totalorder %v333, %v344
        %vm357 = vcmp.eq.s32.totalorder %v333, %v345
        %vm358 = vcmp.eq.s32.totalorder %v334, %v344
        %vm359 = vcmp.eq.s32.totalorder %v334, %v345
        %vm360 = vcmp.eq.s32.totalorder %v335, %v344
        %vm361 = vcmp.eq.s32.totalorder %v335, %v345
        %vm362 = vcmp.eq.s32.totalorder %v336, %v344
        %vm363 = vcmp.eq.s32.totalorder %v336, %v345
        %vm364 = vcmp.eq.s32.totalorder %v337, %v344
        %vm365 = vcmp.eq.s32.totalorder %v337, %v345
        %vm366 = vcmp.eq.s32.totalorder %v338, %v344
        %vm367 = vcmp.eq.s32.totalorder %v338, %v345
        %vm368 = vcmp.eq.s32.totalorder %v339, %v344
        %vm369 = vcmp.eq.s32.totalorder %v339, %v345
        %vm370 = vcmp.eq.s32.totalorder %v340, %v344
        %vm371 = vcmp.eq.s32.totalorder %v340, %v345
        %vm372 = vcmp.eq.s32.totalorder %v341, %v344
        %vm373 = vcmp.eq.s32.totalorder %v341, %v345
        %vm374 = vcmp.eq.s32.totalorder %v342, %v344
        %vm375 = vcmp.eq.s32.totalorder %v342, %v345
        %vm376 = vcmp.eq.s32.totalorder %v343, %v344
        %vm377 = vcmp.eq.s32.totalorder %v343, %v345
        %v378 = vsel %vm346, 1.0, 0.0
        %v379 = vsel %vm347, 1.0, 0.0
        %v380 = vsel %vm348, 1.0, 0.0
        %v381 = vsel %vm349, 1.0, 0.0
        %v382 = vsel %vm350, 1.0, 0.0
        %v383 = vsel %vm351, 1.0, 0.0
        %v384 = vsel %vm352, 1.0, 0.0
        %v385 = vsel %vm353, 1.0, 0.0
        %v386 = vsel %vm354, 1.0, 0.0
        %v387 = vsel %vm355, 1.0, 0.0
        %v388 = vsel %vm356, 1.0, 0.0
        %v389 = vsel %vm357, 1.0, 0.0
        %v390 = vsel %vm358, 1.0, 0.0
        %v391 = vsel %vm359, 1.0, 0.0
        %v392 = vsel %vm360, 1.0, 0.0
        %v393 = vsel %vm361, 1.0, 0.0
        %v394 = vsel %vm362, 1.0, 0.0
        %v395 = vsel %vm363, 1.0, 0.0
        %v396 = vsel %vm364, 1.0, 0.0
        %v397 = vsel %vm365, 1.0, 0.0
        %v398 = vsel %vm366, 1.0, 0.0
        %v399 = vsel %vm367, 1.0, 0.0
        %v400 = vsel %vm368, 1.0, 0.0
        %v401 = vsel %vm369, 1.0, 0.0
        %v402 = vsel %vm370, 1.0, 0.0
        %v403 = vsel %vm371, 1.0, 0.0
        %v404 = vsel %vm372, 1.0, 0.0
        %v405 = vsel %vm373, 1.0, 0.0
        %v406 = vsel %vm374, 1.0, 0.0
        %v407 = vsel %vm375, 1.0, 0.0
        %v408 = vsel %vm376, 1.0, 0.0
        %v409 = vsel %vm377, 1.0, 0.0
        %v410 = vperm.slane %v326, 0
        %v411 = vperm.slane %v326, 1
        %vm412 = vcmp.eq.s32.totalorder %v328, %v410
        %vm413 = vcmp.eq.s32.totalorder %v328, %v411
        %vm414 = vcmp.eq.s32.totalorder %v329, %v410
        %vm415 = vcmp.eq.s32.totalorder %v329, %v411
        %vm416 = vcmp.eq.s32.totalorder %v330, %v410
        %vm417 = vcmp.eq.s32.totalorder %v330, %v411
        %vm418 = vcmp.eq.s32.totalorder %v331, %v410
        %vm419 = vcmp.eq.s32.totalorder %v331, %v411
        %vm420 = vcmp.eq.s32.totalorder %v332, %v410
        %vm421 = vcmp.eq.s32.totalorder %v332, %v411
        %vm422 = vcmp.eq.s32.totalorder %v333, %v410
        %vm423 = vcmp.eq.s32.totalorder %v333, %v411
        %vm424 = vcmp.eq.s32.totalorder %v334, %v410
        %vm425 = vcmp.eq.s32.totalorder %v334, %v411
        %vm426 = vcmp.eq.s32.totalorder %v335, %v410
        %vm427 = vcmp.eq.s32.totalorder %v335, %v411
        %vm428 = vcmp.eq.s32.totalorder %v336, %v410
        %vm429 = vcmp.eq.s32.totalorder %v336, %v411
        %vm430 = vcmp.eq.s32.totalorder %v337, %v410
        %vm431 = vcmp.eq.s32.totalorder %v337, %v411
        %vm432 = vcmp.eq.s32.totalorder %v338, %v410
        %vm433 = vcmp.eq.s32.totalorder %v338, %v411
        %vm434 = vcmp.eq.s32.totalorder %v339, %v410
        %vm435 = vcmp.eq.s32.totalorder %v339, %v411
        %vm436 = vcmp.eq.s32.totalorder %v340, %v410
        %vm437 = vcmp.eq.s32.totalorder %v340, %v411
        %vm438 = vcmp.eq.s32.totalorder %v341, %v410
        %vm439 = vcmp.eq.s32.totalorder %v341, %v411
        %vm440 = vcmp.eq.s32.totalorder %v342, %v410
        %vm441 = vcmp.eq.s32.totalorder %v342, %v411
        %vm442 = vcmp.eq.s32.totalorder %v343, %v410
        %vm443 = vcmp.eq.s32.totalorder %v343, %v411
        %v444 = vsel %vm412, 1.0, 0.0
        %v445 = vsel %vm413, 1.0, 0.0
        %v446 = vsel %vm414, 1.0, 0.0
        %v447 = vsel %vm415, 1.0, 0.0
        %v448 = vsel %vm416, 1.0, 0.0
        %v449 = vsel %vm417, 1.0, 0.0
        %v450 = vsel %vm418, 1.0, 0.0
        %v451 = vsel %vm419, 1.0, 0.0
        %v452 = vsel %vm420, 1.0, 0.0
        %v453 = vsel %vm421, 1.0, 0.0
        %v454 = vsel %vm422, 1.0, 0.0
        %v455 = vsel %vm423, 1.0, 0.0
        %v456 = vsel %vm424, 1.0, 0.0
        %v457 = vsel %vm425, 1.0, 0.0
        %v458 = vsel %vm426, 1.0, 0.0
        %v459 = vsel %vm427, 1.0, 0.0
        %v460 = vsel %vm428, 1.0, 0.0
        %v461 = vsel %vm429, 1.0, 0.0
        %v462 = vsel %vm430, 1.0, 0.0
        %v463 = vsel %vm431, 1.0, 0.0
        %v464 = vsel %vm432, 1.0, 0.0
        %v465 = vsel %vm433, 1.0, 0.0
        %v466 = vsel %vm434, 1.0, 0.0
        %v467 = vsel %vm435, 1.0, 0.0
        %v468 = vsel %vm436, 1.0, 0.0
        %v469 = vsel %vm437, 1.0, 0.0
        %v470 = vsel %vm438, 1.0, 0.0
        %v471 = vsel %vm439, 1.0, 0.0
        %v472 = vsel %vm440, 1.0, 0.0
        %v473 = vsel %vm441, 1.0, 0.0
        %v474 = vsel %vm442, 1.0, 0.0
        %v475 = vsel %vm443, 1.0, 0.0
        %v476 = vld [vmem:[%s2] sm:$0xff]
        %v477 = vld [vmem:[%s2 + $0x8] sm:$0xff]
        %v478 = vld [vmem:[%s2 + $0x10] sm:$0xff]
        %v479 = vld [vmem:[%s2 + $0x18] sm:$0xff]
        %480 = vmatpush.msra.mxu0 %v408
        %481 = vmatpush.msra.mxu0 %v406
        %482 = vmatpush.msra.mxu0 %v404
        %483 = vmatpush.msra.mxu0 %v402
        %484 = vmatpush.msra.mxu0 %v400
        %485 = vmatpush.msra.mxu0 %v398
        %486 = vmatpush.msra.mxu0 %v396
        %487 = vmatpush.msra.mxu0 %v394
        %488 = vmatpush.msra.mxu0 %v392
        %489 = vmatpush.msra.mxu0 %v390
        %490 = vmatpush.msra.mxu0 %v388
        %491 = vmatpush.msra.mxu0 %v386
        %492 = vmatpush.msra.mxu0 %v384
        %493 = vmatpush.msra.mxu0 %v382
        %494 = vmatpush.msra.mxu0 %v380
        %495 = vmatpush.msra.mxu0 %v378
        %v496 = vand.u32 %v476, 4294901760
        %v497 = vsub.f32 %v476, %v496
        %v498 = vand.u32 %v497, 4294901760
        %v499 = vsub.f32 %v497, %v498
        %v500 = vand.u32 %v499, 4294901760
        %501 = vmatmul.f32.gmra.mxu0 %v500
        %v502 = vpop.f32.mrf.mxu0
        %v503 = vadd.f32 0.0, %v502
        %v504 = vand.u32 %v477, 4294901760
        %v505 = vsub.f32 %v477, %v504
        %v506 = vand.u32 %v505, 4294901760
        %v507 = vsub.f32 %v505, %v506
        %v508 = vand.u32 %v507, 4294901760
        %509 = vmatmul.f32.gmra.mxu0 %v508
        %v510 = vpop.f32.mrf.mxu0
        %v511 = vadd.f32 0.0, %v510
        %v512 = vand.u32 %v478, 4294901760
        %v513 = vsub.f32 %v478, %v512
        %v514 = vand.u32 %v513, 4294901760
        %v515 = vsub.f32 %v513, %v514
        %v516 = vand.u32 %v515, 4294901760
        %517 = vmatmul.f32.gmra.mxu0 %v516
        %v518 = vpop.f32.mrf.mxu0
        %v519 = vadd.f32 0.0, %v518
        %v520 = vand.u32 %v479, 4294901760
        %v521 = vsub.f32 %v479, %v520
        %v522 = vand.u32 %v521, 4294901760
        %v523 = vsub.f32 %v521, %v522
        %v524 = vand.u32 %v523, 4294901760
        %525 = vmatmul.f32.gmra.mxu0 %v524
        %v526 = vpop.f32.mrf.mxu0
        %v527 = vadd.f32 0.0, %v526
        %528 = vdwg.mxu0
        %v529 = vsub.f32 %v408, %v408
        %v530 = vand.u32 %v529, 4294901760
        %v531 = vsub.f32 %v529, %v530
        %v532 = vand.u32 %v531, 4294901760
        %533 = vmatpush.msra.mxu0 %v532
        %v534 = vsub.f32 %v406, %v406
        %v535 = vand.u32 %v534, 4294901760
        %v536 = vsub.f32 %v534, %v535
        %v537 = vand.u32 %v536, 4294901760
        %538 = vmatpush.msra.mxu0 %v537
        %v539 = vsub.f32 %v404, %v404
        %v540 = vand.u32 %v539, 4294901760
        %v541 = vsub.f32 %v539, %v540
        %v542 = vand.u32 %v541, 4294901760
        %543 = vmatpush.msra.mxu0 %v542
        %v544 = vsub.f32 %v402, %v402
        %v545 = vand.u32 %v544, 4294901760
        %v546 = vsub.f32 %v544, %v545
        %v547 = vand.u32 %v546, 4294901760
        %548 = vmatpush.msra.mxu0 %v547
        %v549 = vsub.f32 %v400, %v400
        %v550 = vand.u32 %v549, 4294901760
        %v551 = vsub.f32 %v549, %v550
        %v552 = vand.u32 %v551, 4294901760
        %553 = vmatpush.msra.mxu0 %v552
        %v554 = vsub.f32 %v398, %v398
        %v555 = vand.u32 %v554, 4294901760
        %v556 = vsub.f32 %v554, %v555
        %v557 = vand.u32 %v556, 4294901760
        %558 = vmatpush.msra.mxu0 %v557
        %v559 = vsub.f32 %v396, %v396
        %v560 = vand.u32 %v559, 4294901760
        %v561 = vsub.f32 %v559, %v560
        %v562 = vand.u32 %v561, 4294901760
        %563 = vmatpush.msra.mxu0 %v562
        %v564 = vsub.f32 %v394, %v394
        %v565 = vand.u32 %v564, 4294901760
        %v566 = vsub.f32 %v564, %v565
        %v567 = vand.u32 %v566, 4294901760
        %568 = vmatpush.msra.mxu0 %v567
        %v569 = vsub.f32 %v392, %v392
        %v570 = vand.u32 %v569, 4294901760
        %v571 = vsub.f32 %v569, %v570
        %v572 = vand.u32 %v571, 4294901760
        %573 = vmatpush.msra.mxu0 %v572
        %v574 = vsub.f32 %v390, %v390
        %v575 = vand.u32 %v574, 4294901760
        %v576 = vsub.f32 %v574, %v575
        %v577 = vand.u32 %v576, 4294901760
        %578 = vmatpush.msra.mxu0 %v577
        %v579 = vsub.f32 %v388, %v388
        %v580 = vand.u32 %v579, 4294901760
        %v581 = vsub.f32 %v579, %v580
        %v582 = vand.u32 %v581, 4294901760
        %583 = vmatpush.msra.mxu0 %v582
        %v584 = vsub.f32 %v386, %v386
        %v585 = vand.u32 %v584, 4294901760
        %v586 = vsub.f32 %v584, %v585
        %v587 = vand.u32 %v586, 4294901760
        %588 = vmatpush.msra.mxu0 %v587
        %v589 = vsub.f32 %v384, %v384
        %v590 = vand.u32 %v589, 4294901760
        %v591 = vsub.f32 %v589, %v590
        %v592 = vand.u32 %v591, 4294901760
        %593 = vmatpush.msra.mxu0 %v592
        %v594 = vsub.f32 %v382, %v382
        %v595 = vand.u32 %v594, 4294901760
        %v596 = vsub.f32 %v594, %v595
        %v597 = vand.u32 %v596, 4294901760
        %598 = vmatpush.msra.mxu0 %v597
        %v599 = vsub.f32 %v380, %v380
        %v600 = vand.u32 %v599, 4294901760
        %v601 = vsub.f32 %v599, %v600
        %v602 = vand.u32 %v601, 4294901760
        %603 = vmatpush.msra.mxu0 %v602
        %v604 = vsub.f32 %v378, %v378
        %v605 = vand.u32 %v604, 4294901760
        %v606 = vsub.f32 %v604, %v605
        %v607 = vand.u32 %v606, 4294901760
        %608 = vmatpush.msra.mxu0 %v607
        %v609 = vand.u32 %v476, 4294901760
        %610 = vmatmul.f32.gmra.mxu0 %v609
        %v611 = vpop.f32.mrf.mxu0
        %v612 = vadd.f32 %v503, %v611
        %v613 = vand.u32 %v477, 4294901760
        %614 = vmatmul.f32.gmra.mxu0 %v613
        %v615 = vpop.f32.mrf.mxu0
        %v616 = vadd.f32 %v511, %v615
        %v617 = vand.u32 %v478, 4294901760
        %618 = vmatmul.f32.gmra.mxu0 %v617
        %v619 = vpop.f32.mrf.mxu0
        %v620 = vadd.f32 %v519, %v619
        %v621 = vand.u32 %v479, 4294901760
        %622 = vmatmul.f32.gmra.mxu0 %v621
        %v623 = vpop.f32.mrf.mxu0
        %v624 = vadd.f32 %v527, %v623
        %625 = vdwg.mxu0
        %v626 = vsub.f32 %v408, %v408
        %627 = vmatpush.msra.mxu0 %v626
        %v628 = vsub.f32 %v406, %v406
        %629 = vmatpush.msra.mxu0 %v628
        %v630 = vsub.f32 %v404, %v404
        %631 = vmatpush.msra.mxu0 %v630
        %v632 = vsub.f32 %v402, %v402
        %633 = vmatpush.msra.mxu0 %v632
        %v634 = vsub.f32 %v400, %v400
        %635 = vmatpush.msra.mxu0 %v634
        %v636 = vsub.f32 %v398, %v398
        %637 = vmatpush.msra.mxu0 %v636
        %v638 = vsub.f32 %v396, %v396
        %639 = vmatpush.msra.mxu0 %v638
        %v640 = vsub.f32 %v394, %v394
        %641 = vmatpush.msra.mxu0 %v640
        %v642 = vsub.f32 %v392, %v392
        %643 = vmatpush.msra.mxu0 %v642
        %v644 = vsub.f32 %v390, %v390
        %645 = vmatpush.msra.mxu0 %v644
        %v646 = vsub.f32 %v388, %v388
        %647 = vmatpush.msra.mxu0 %v646
        %v648 = vsub.f32 %v386, %v386
        %649 = vmatpush.msra.mxu0 %v648
        %v650 = vsub.f32 %v384, %v384
        %651 = vmatpush.msra.mxu0 %v650
        %v652 = vsub.f32 %v382, %v382
        %653 = vmatpush.msra.mxu0 %v652
        %v654 = vsub.f32 %v380, %v380
        %655 = vmatpush.msra.mxu0 %v654
        %v656 = vsub.f32 %v378, %v378
        %657 = vmatpush.msra.mxu0 %v656
        %v658 = vand.u32 %v476, 4294901760
        %v659 = vsub.f32 %v476, %v658
        %660 = vmatmul.f32.gmra.mxu0 %v659
        %v661 = vpop.f32.mrf.mxu0
        %v662 = vadd.f32 %v612, %v661
        %v663 = vand.u32 %v477, 4294901760
        %v664 = vsub.f32 %v477, %v663
        %665 = vmatmul.f32.gmra.mxu0 %v664
        %v666 = vpop.f32.mrf.mxu0
        %v667 = vadd.f32 %v616, %v666
        %v668 = vand.u32 %v478, 4294901760
        %v669 = vsub.f32 %v478, %v668
        %670 = vmatmul.f32.gmra.mxu0 %v669
        %v671 = vpop.f32.mrf.mxu0
        %v672 = vadd.f32 %v620, %v671
        %v673 = vand.u32 %v479, 4294901760
        %v674 = vsub.f32 %v479, %v673
        %675 = vmatmul.f32.gmra.mxu0 %v674
        %v676 = vpop.f32.mrf.mxu0
        %v677 = vadd.f32 %v624, %v676
        %678 = vdwg.mxu0
        %679 = vmatpush.msra.mxu0 %v408
        %680 = vmatpush.msra.mxu0 %v406
        %681 = vmatpush.msra.mxu0 %v404
        %682 = vmatpush.msra.mxu0 %v402
        %683 = vmatpush.msra.mxu0 %v400
        %684 = vmatpush.msra.mxu0 %v398
        %685 = vmatpush.msra.mxu0 %v396
        %686 = vmatpush.msra.mxu0 %v394
        %687 = vmatpush.msra.mxu0 %v392
        %688 = vmatpush.msra.mxu0 %v390
        %689 = vmatpush.msra.mxu0 %v388
        %690 = vmatpush.msra.mxu0 %v386
        %691 = vmatpush.msra.mxu0 %v384
        %692 = vmatpush.msra.mxu0 %v382
        %693 = vmatpush.msra.mxu0 %v380
        %694 = vmatpush.msra.mxu0 %v378
        %v695 = vand.u32 %v476, 4294901760
        %v696 = vsub.f32 %v476, %v695
        %v697 = vand.u32 %v696, 4294901760
        %698 = vmatmul.f32.gmra.mxu0 %v697
        %v699 = vpop.f32.mrf.mxu0
        %v700 = vadd.f32 %v662, %v699
        %v701 = vand.u32 %v477, 4294901760
        %v702 = vsub.f32 %v477, %v701
        %v703 = vand.u32 %v702, 4294901760
        %704 = vmatmul.f32.gmra.mxu0 %v703
        %v705 = vpop.f32.mrf.mxu0
        %v706 = vadd.f32 %v667, %v705
        %v707 = vand.u32 %v478, 4294901760
        %v708 = vsub.f32 %v478, %v707
        %v709 = vand.u32 %v708, 4294901760
        %710 = vmatmul.f32.gmra.mxu0 %v709
        %v711 = vpop.f32.mrf.mxu0
        %v712 = vadd.f32 %v672, %v711
        %v713 = vand.u32 %v479, 4294901760
        %v714 = vsub.f32 %v479, %v713
        %v715 = vand.u32 %v714, 4294901760
        %716 = vmatmul.f32.gmra.mxu0 %v715
        %v717 = vpop.f32.mrf.mxu0
        %v718 = vadd.f32 %v677, %v717
        %719 = vdwg.mxu0
        %v720 = vsub.f32 %v408, %v408
        %v721 = vand.u32 %v720, 4294901760
        %722 = vmatpush.msra.mxu0 %v721
        %v723 = vsub.f32 %v406, %v406
        %v724 = vand.u32 %v723, 4294901760
        %725 = vmatpush.msra.mxu0 %v724
        %v726 = vsub.f32 %v404, %v404
        %v727 = vand.u32 %v726, 4294901760
        %728 = vmatpush.msra.mxu0 %v727
        %v729 = vsub.f32 %v402, %v402
        %v730 = vand.u32 %v729, 4294901760
        %731 = vmatpush.msra.mxu0 %v730
        %v732 = vsub.f32 %v400, %v400
        %v733 = vand.u32 %v732, 4294901760
        %734 = vmatpush.msra.mxu0 %v733
        %v735 = vsub.f32 %v398, %v398
        %v736 = vand.u32 %v735, 4294901760
        %737 = vmatpush.msra.mxu0 %v736
        %v738 = vsub.f32 %v396, %v396
        %v739 = vand.u32 %v738, 4294901760
        %740 = vmatpush.msra.mxu0 %v739
        %v741 = vsub.f32 %v394, %v394
        %v742 = vand.u32 %v741, 4294901760
        %743 = vmatpush.msra.mxu0 %v742
        %v744 = vsub.f32 %v392, %v392
        %v745 = vand.u32 %v744, 4294901760
        %746 = vmatpush.msra.mxu0 %v745
        %v747 = vsub.f32 %v390, %v390
        %v748 = vand.u32 %v747, 4294901760
        %749 = vmatpush.msra.mxu0 %v748
        %v750 = vsub.f32 %v388, %v388
        %v751 = vand.u32 %v750, 4294901760
        %752 = vmatpush.msra.mxu0 %v751
        %v753 = vsub.f32 %v386, %v386
        %v754 = vand.u32 %v753, 4294901760
        %755 = vmatpush.msra.mxu0 %v754
        %v756 = vsub.f32 %v384, %v384
        %v757 = vand.u32 %v756, 4294901760
        %758 = vmatpush.msra.mxu0 %v757
        %v759 = vsub.f32 %v382, %v382
        %v760 = vand.u32 %v759, 4294901760
        %761 = vmatpush.msra.mxu0 %v760
        %v762 = vsub.f32 %v380, %v380
        %v763 = vand.u32 %v762, 4294901760
        %764 = vmatpush.msra.mxu0 %v763
        %v765 = vsub.f32 %v378, %v378
        %v766 = vand.u32 %v765, 4294901760
        %767 = vmatpush.msra.mxu0 %v766
        %v768 = vand.u32 %v476, 4294901760
        %769 = vmatmul.f32.gmra.mxu0 %v768
        %v770 = vpop.f32.mrf.mxu0
        %v771 = vadd.f32 %v700, %v770
        %v772 = vand.u32 %v477, 4294901760
        %773 = vmatmul.f32.gmra.mxu0 %v772
        %v774 = vpop.f32.mrf.mxu0
        %v775 = vadd.f32 %v706, %v774
        %v776 = vand.u32 %v478, 4294901760
        %777 = vmatmul.f32.gmra.mxu0 %v776
        %v778 = vpop.f32.mrf.mxu0
        %v779 = vadd.f32 %v712, %v778
        %v780 = vand.u32 %v479, 4294901760
        %781 = vmatmul.f32.gmra.mxu0 %v780
        %v782 = vpop.f32.mrf.mxu0
        %v783 = vadd.f32 %v718, %v782
        %784 = vdwg.mxu0
        %785 = vmatpush.msra.mxu0 %v408
        %786 = vmatpush.msra.mxu0 %v406
        %787 = vmatpush.msra.mxu0 %v404
        %788 = vmatpush.msra.mxu0 %v402
        %789 = vmatpush.msra.mxu0 %v400
        %790 = vmatpush.msra.mxu0 %v398
        %791 = vmatpush.msra.mxu0 %v396
        %792 = vmatpush.msra.mxu0 %v394
        %793 = vmatpush.msra.mxu0 %v392
        %794 = vmatpush.msra.mxu0 %v390
        %795 = vmatpush.msra.mxu0 %v388
        %796 = vmatpush.msra.mxu0 %v386
        %797 = vmatpush.msra.mxu0 %v384
        %798 = vmatpush.msra.mxu0 %v382
        %799 = vmatpush.msra.mxu0 %v380
        %800 = vmatpush.msra.mxu0 %v378
        %v801 = vand.u32 %v476, 4294901760
        %802 = vmatmul.f32.gmra.mxu0 %v801
        %v803 = vpop.f32.mrf.mxu0
        %v804 = vadd.f32 %v771, %v803
        %v805 = vand.u32 %v477, 4294901760
        %806 = vmatmul.f32.gmra.mxu0 %v805
        %v807 = vpop.f32.mrf.mxu0
        %v808 = vadd.f32 %v775, %v807
        %v809 = vand.u32 %v478, 4294901760
        %810 = vmatmul.f32.gmra.mxu0 %v809
        %v811 = vpop.f32.mrf.mxu0
        %v812 = vadd.f32 %v779, %v811
        %v813 = vand.u32 %v479, 4294901760
        %814 = vmatmul.f32.gmra.mxu0 %v813
        %v815 = vpop.f32.mrf.mxu0
        %v816 = vadd.f32 %v783, %v815
        %817 = vdwg.mxu0
        %818 = vmatpush.msra.mxu0 %v409
        %819 = vmatpush.msra.mxu0 %v407
        %820 = vmatpush.msra.mxu0 %v405
        %821 = vmatpush.msra.mxu0 %v403
        %822 = vmatpush.msra.mxu0 %v401
        %823 = vmatpush.msra.mxu0 %v399
        %824 = vmatpush.msra.mxu0 %v397
        %825 = vmatpush.msra.mxu0 %v395
        %826 = vmatpush.msra.mxu0 %v393
        %827 = vmatpush.msra.mxu0 %v391
        %828 = vmatpush.msra.mxu0 %v389
        %829 = vmatpush.msra.mxu0 %v387
        %830 = vmatpush.msra.mxu0 %v385
        %831 = vmatpush.msra.mxu0 %v383
        %832 = vmatpush.msra.mxu0 %v381
        %833 = vmatpush.msra.mxu0 %v379
        %v834 = vand.u32 %v476, 4294901760
        %v835 = vsub.f32 %v476, %v834
        %v836 = vand.u32 %v835, 4294901760
        %v837 = vsub.f32 %v835, %v836
        %v838 = vand.u32 %v837, 4294901760
        %839 = vmatmul.f32.gmra.mxu0 %v838
        %v840 = vpop.f32.mrf.mxu0
        %v841 = vadd.f32 0.0, %v840
        %v842 = vand.u32 %v477, 4294901760
        %v843 = vsub.f32 %v477, %v842
        %v844 = vand.u32 %v843, 4294901760
        %v845 = vsub.f32 %v843, %v844
        %v846 = vand.u32 %v845, 4294901760
        %847 = vmatmul.f32.gmra.mxu0 %v846
        %v848 = vpop.f32.mrf.mxu0
        %v849 = vadd.f32 0.0, %v848
        %v850 = vand.u32 %v478, 4294901760
        %v851 = vsub.f32 %v478, %v850
        %v852 = vand.u32 %v851, 4294901760
        %v853 = vsub.f32 %v851, %v852
        %v854 = vand.u32 %v853, 4294901760
        %855 = vmatmul.f32.gmra.mxu0 %v854
        %v856 = vpop.f32.mrf.mxu0
        %v857 = vadd.f32 0.0, %v856
        %v858 = vand.u32 %v479, 4294901760
        %v859 = vsub.f32 %v479, %v858
        %v860 = vand.u32 %v859, 4294901760
        %v861 = vsub.f32 %v859, %v860
        %v862 = vand.u32 %v861, 4294901760
        %863 = vmatmul.f32.gmra.mxu0 %v862
        %v864 = vpop.f32.mrf.mxu0
        %v865 = vadd.f32 0.0, %v864
        %866 = vdwg.mxu0
        %v867 = vsub.f32 %v409, %v409
        %v868 = vand.u32 %v867, 4294901760
        %v869 = vsub.f32 %v867, %v868
        %v870 = vand.u32 %v869, 4294901760
        %871 = vmatpush.msra.mxu0 %v870
        %v872 = vsub.f32 %v407, %v407
        %v873 = vand.u32 %v872, 4294901760
        %v874 = vsub.f32 %v872, %v873
        %v875 = vand.u32 %v874, 4294901760
        %876 = vmatpush.msra.mxu0 %v875
        %v877 = vsub.f32 %v405, %v405
        %v878 = vand.u32 %v877, 4294901760
        %v879 = vsub.f32 %v877, %v878
        %v880 = vand.u32 %v879, 4294901760
        %881 = vmatpush.msra.mxu0 %v880
        %v882 = vsub.f32 %v403, %v403
        %v883 = vand.u32 %v882, 4294901760
        %v884 = vsub.f32 %v882, %v883
        %v885 = vand.u32 %v884, 4294901760
        %886 = vmatpush.msra.mxu0 %v885
        %v887 = vsub.f32 %v401, %v401
        %v888 = vand.u32 %v887, 4294901760
        %v889 = vsub.f32 %v887, %v888
        %v890 = vand.u32 %v889, 4294901760
        %891 = vmatpush.msra.mxu0 %v890
        %v892 = vsub.f32 %v399, %v399
        %v893 = vand.u32 %v892, 4294901760
        %v894 = vsub.f32 %v892, %v893
        %v895 = vand.u32 %v894, 4294901760
        %896 = vmatpush.msra.mxu0 %v895
        %v897 = vsub.f32 %v397, %v397
        %v898 = vand.u32 %v897, 4294901760
        %v899 = vsub.f32 %v897, %v898
        %v900 = vand.u32 %v899, 4294901760
        %901 = vmatpush.msra.mxu0 %v900
        %v902 = vsub.f32 %v395, %v395
        %v903 = vand.u32 %v902, 4294901760
        %v904 = vsub.f32 %v902, %v903
        %v905 = vand.u32 %v904, 4294901760
        %906 = vmatpush.msra.mxu0 %v905
        %v907 = vsub.f32 %v393, %v393
        %v908 = vand.u32 %v907, 4294901760
        %v909 = vsub.f32 %v907, %v908
        %v910 = vand.u32 %v909, 4294901760
        %911 = vmatpush.msra.mxu0 %v910
        %v912 = vsub.f32 %v391, %v391
        %v913 = vand.u32 %v912, 4294901760
        %v914 = vsub.f32 %v912, %v913
        %v915 = vand.u32 %v914, 4294901760
        %916 = vmatpush.msra.mxu0 %v915
        %v917 = vsub.f32 %v389, %v389
        %v918 = vand.u32 %v917, 4294901760
        %v919 = vsub.f32 %v917, %v918
        %v920 = vand.u32 %v919, 4294901760
        %921 = vmatpush.msra.mxu0 %v920
        %v922 = vsub.f32 %v387, %v387
        %v923 = vand.u32 %v922, 4294901760
        %v924 = vsub.f32 %v922, %v923
        %v925 = vand.u32 %v924, 4294901760
        %926 = vmatpush.msra.mxu0 %v925
        %v927 = vsub.f32 %v385, %v385
        %v928 = vand.u32 %v927, 4294901760
        %v929 = vsub.f32 %v927, %v928
        %v930 = vand.u32 %v929, 4294901760
        %931 = vmatpush.msra.mxu0 %v930
        %v932 = vsub.f32 %v383, %v383
        %v933 = vand.u32 %v932, 4294901760
        %v934 = vsub.f32 %v932, %v933
        %v935 = vand.u32 %v934, 4294901760
        %936 = vmatpush.msra.mxu0 %v935
        %v937 = vsub.f32 %v381, %v381
        %v938 = vand.u32 %v937, 4294901760
        %v939 = vsub.f32 %v937, %v938
        %v940 = vand.u32 %v939, 4294901760
        %941 = vmatpush.msra.mxu0 %v940
        %v942 = vsub.f32 %v379, %v379
        %v943 = vand.u32 %v942, 4294901760
        %v944 = vsub.f32 %v942, %v943
        %v945 = vand.u32 %v944, 4294901760
        %946 = vmatpush.msra.mxu0 %v945
        %v947 = vand.u32 %v476, 4294901760
        %948 = vmatmul.f32.gmra.mxu0 %v947
        %v949 = vpop.f32.mrf.mxu0
        %v950 = vadd.f32 %v841, %v949
        %v951 = vand.u32 %v477, 4294901760
        %952 = vmatmul.f32.gmra.mxu0 %v951
        %v953 = vpop.f32.mrf.mxu0
        %v954 = vadd.f32 %v849, %v953
        %v955 = vand.u32 %v478, 4294901760
        %956 = vmatmul.f32.gmra.mxu0 %v955
        %v957 = vpop.f32.mrf.mxu0
        %v958 = vadd.f32 %v857, %v957
        %v959 = vand.u32 %v479, 4294901760
        %960 = vmatmul.f32.gmra.mxu0 %v959
        %v961 = vpop.f32.mrf.mxu0
        %v962 = vadd.f32 %v865, %v961
        %963 = vdwg.mxu0
        %v964 = vsub.f32 %v409, %v409
        %965 = vmatpush.msra.mxu0 %v964
        %v966 = vsub.f32 %v407, %v407
        %967 = vmatpush.msra.mxu0 %v966
        %v968 = vsub.f32 %v405, %v405
        %969 = vmatpush.msra.mxu0 %v968
        %v970 = vsub.f32 %v403, %v403
        %971 = vmatpush.msra.mxu0 %v970
        %v972 = vsub.f32 %v401, %v401
        %973 = vmatpush.msra.mxu0 %v972
        %v974 = vsub.f32 %v399, %v399
        %975 = vmatpush.msra.mxu0 %v974
        %v976 = vsub.f32 %v397, %v397
        %977 = vmatpush.msra.mxu0 %v976
        %v978 = vsub.f32 %v395, %v395
        %979 = vmatpush.msra.mxu0 %v978
        %v980 = vsub.f32 %v393, %v393
        %981 = vmatpush.msra.mxu0 %v980
        %v982 = vsub.f32 %v391, %v391
        %983 = vmatpush.msra.mxu0 %v982
        %v984 = vsub.f32 %v389, %v389
        %985 = vmatpush.msra.mxu0 %v984
        %v986 = vsub.f32 %v387, %v387
        %987 = vmatpush.msra.mxu0 %v986
        %v988 = vsub.f32 %v385, %v385
        %989 = vmatpush.msra.mxu0 %v988
        %v990 = vsub.f32 %v383, %v383
        %991 = vmatpush.msra.mxu0 %v990
        %v992 = vsub.f32 %v381, %v381
        %993 = vmatpush.msra.mxu0 %v992
        %v994 = vsub.f32 %v379, %v379
        %995 = vmatpush.msra.mxu0 %v994
        %v996 = vand.u32 %v476, 4294901760
        %v997 = vsub.f32 %v476, %v996
        %998 = vmatmul.f32.gmra.mxu0 %v997
        %v999 = vpop.f32.mrf.mxu0
        %v1000 = vadd.f32 %v950, %v999
        %v1001 = vand.u32 %v477, 4294901760
        %v1002 = vsub.f32 %v477, %v1001
        %1003 = vmatmul.f32.gmra.mxu0 %v1002
        %v1004 = vpop.f32.mrf.mxu0
        %v1005 = vadd.f32 %v954, %v1004
        %v1006 = vand.u32 %v478, 4294901760
        %v1007 = vsub.f32 %v478, %v1006
        %1008 = vmatmul.f32.gmra.mxu0 %v1007
        %v1009 = vpop.f32.mrf.mxu0
        %v1010 = vadd.f32 %v958, %v1009
        %v1011 = vand.u32 %v479, 4294901760
        %v1012 = vsub.f32 %v479, %v1011
        %1013 = vmatmul.f32.gmra.mxu0 %v1012
        %v1014 = vpop.f32.mrf.mxu0
        %v1015 = vadd.f32 %v962, %v1014
        %1016 = vdwg.mxu0
        %1017 = vmatpush.msra.mxu0 %v409
        %1018 = vmatpush.msra.mxu0 %v407
        %1019 = vmatpush.msra.mxu0 %v405
        %1020 = vmatpush.msra.mxu0 %v403
        %1021 = vmatpush.msra.mxu0 %v401
        %1022 = vmatpush.msra.mxu0 %v399
        %1023 = vmatpush.msra.mxu0 %v397
        %1024 = vmatpush.msra.mxu0 %v395
        %1025 = vmatpush.msra.mxu0 %v393
        %1026 = vmatpush.msra.mxu0 %v391
        %1027 = vmatpush.msra.mxu0 %v389
        %1028 = vmatpush.msra.mxu0 %v387
        %1029 = vmatpush.msra.mxu0 %v385
        %1030 = vmatpush.msra.mxu0 %v383
        %1031 = vmatpush.msra.mxu0 %v381
        %1032 = vmatpush.msra.mxu0 %v379
        %v1033 = vand.u32 %v476, 4294901760
        %v1034 = vsub.f32 %v476, %v1033
        %v1035 = vand.u32 %v1034, 4294901760
        %1036 = vmatmul.f32.gmra.mxu0 %v1035
        %v1037 = vpop.f32.mrf.mxu0
        %v1038 = vadd.f32 %v1000, %v1037
        %v1039 = vand.u32 %v477, 4294901760
        %v1040 = vsub.f32 %v477, %v1039
        %v1041 = vand.u32 %v1040, 4294901760
        %1042 = vmatmul.f32.gmra.mxu0 %v1041
        %v1043 = vpop.f32.mrf.mxu0
        %v1044 = vadd.f32 %v1005, %v1043
        %v1045 = vand.u32 %v478, 4294901760
        %v1046 = vsub.f32 %v478, %v1045
        %v1047 = vand.u32 %v1046, 4294901760
        %1048 = vmatmul.f32.gmra.mxu0 %v1047
        %v1049 = vpop.f32.mrf.mxu0
        %v1050 = vadd.f32 %v1010, %v1049
        %v1051 = vand.u32 %v479, 4294901760
        %v1052 = vsub.f32 %v479, %v1051
        %v1053 = vand.u32 %v1052, 4294901760
        %1054 = vmatmul.f32.gmra.mxu0 %v1053
        %v1055 = vpop.f32.mrf.mxu0
        %v1056 = vadd.f32 %v1015, %v1055
        %1057 = vdwg.mxu0
        %v1058 = vsub.f32 %v409, %v409
        %v1059 = vand.u32 %v1058, 4294901760
        %1060 = vmatpush.msra.mxu0 %v1059
        %v1061 = vsub.f32 %v407, %v407
        %v1062 = vand.u32 %v1061, 4294901760
        %1063 = vmatpush.msra.mxu0 %v1062
        %v1064 = vsub.f32 %v405, %v405
        %v1065 = vand.u32 %v1064, 4294901760
        %1066 = vmatpush.msra.mxu0 %v1065
        %v1067 = vsub.f32 %v403, %v403
        %v1068 = vand.u32 %v1067, 4294901760
        %1069 = vmatpush.msra.mxu0 %v1068
        %v1070 = vsub.f32 %v401, %v401
        %v1071 = vand.u32 %v1070, 4294901760
        %1072 = vmatpush.msra.mxu0 %v1071
        %v1073 = vsub.f32 %v399, %v399
        %v1074 = vand.u32 %v1073, 4294901760
        %1075 = vmatpush.msra.mxu0 %v1074
        %v1076 = vsub.f32 %v397, %v397
        %v1077 = vand.u32 %v1076, 4294901760
        %1078 = vmatpush.msra.mxu0 %v1077
        %v1079 = vsub.f32 %v395, %v395
        %v1080 = vand.u32 %v1079, 4294901760
        %1081 = vmatpush.msra.mxu0 %v1080
        %v1082 = vsub.f32 %v393, %v393
        %v1083 = vand.u32 %v1082, 4294901760
        %1084 = vmatpush.msra.mxu0 %v1083
        %v1085 = vsub.f32 %v391, %v391
        %v1086 = vand.u32 %v1085, 4294901760
        %1087 = vmatpush.msra.mxu0 %v1086
        %v1088 = vsub.f32 %v389, %v389
        %v1089 = vand.u32 %v1088, 4294901760
        %1090 = vmatpush.msra.mxu0 %v1089
        %v1091 = vsub.f32 %v387, %v387
        %v1092 = vand.u32 %v1091, 4294901760
        %1093 = vmatpush.msra.mxu0 %v1092
        %v1094 = vsub.f32 %v385, %v385
        %v1095 = vand.u32 %v1094, 4294901760
        %1096 = vmatpush.msra.mxu0 %v1095
        %v1097 = vsub.f32 %v383, %v383
        %v1098 = vand.u32 %v1097, 4294901760
        %1099 = vmatpush.msra.mxu0 %v1098
        %v1100 = vsub.f32 %v381, %v381
        %v1101 = vand.u32 %v1100, 4294901760
        %1102 = vmatpush.msra.mxu0 %v1101
        %v1103 = vsub.f32 %v379, %v379
        %v1104 = vand.u32 %v1103, 4294901760
        %1105 = vmatpush.msra.mxu0 %v1104
        %v1106 = vand.u32 %v476, 4294901760
        %1107 = vmatmul.f32.gmra.mxu0 %v1106
        %v1108 = vpop.f32.mrf.mxu0
        %v1109 = vadd.f32 %v1038, %v1108
        %v1110 = vand.u32 %v477, 4294901760
        %1111 = vmatmul.f32.gmra.mxu0 %v1110
        %v1112 = vpop.f32.mrf.mxu0
        %v1113 = vadd.f32 %v1044, %v1112
        %v1114 = vand.u32 %v478, 4294901760
        %1115 = vmatmul.f32.gmra.mxu0 %v1114
        %v1116 = vpop.f32.mrf.mxu0
        %v1117 = vadd.f32 %v1050, %v1116
        %v1118 = vand.u32 %v479, 4294901760
        %1119 = vmatmul.f32.gmra.mxu0 %v1118
        %v1120 = vpop.f32.mrf.mxu0
        %v1121 = vadd.f32 %v1056, %v1120
        %1122 = vdwg.mxu0
        %1123 = vmatpush.msra.mxu0 %v409
        %1124 = vmatpush.msra.mxu0 %v407
        %1125 = vmatpush.msra.mxu0 %v405
        %1126 = vmatpush.msra.mxu0 %v403
        %1127 = vmatpush.msra.mxu0 %v401
        %1128 = vmatpush.msra.mxu0 %v399
        %1129 = vmatpush.msra.mxu0 %v397
        %1130 = vmatpush.msra.mxu0 %v395
        %1131 = vmatpush.msra.mxu0 %v393
        %1132 = vmatpush.msra.mxu0 %v391
        %1133 = vmatpush.msra.mxu0 %v389
        %1134 = vmatpush.msra.mxu0 %v387
        %1135 = vmatpush.msra.mxu0 %v385
        %1136 = vmatpush.msra.mxu0 %v383
        %1137 = vmatpush.msra.mxu0 %v381
        %1138 = vmatpush.msra.mxu0 %v379
        %v1139 = vand.u32 %v476, 4294901760
        %1140 = vmatmul.f32.gmra.mxu0 %v1139
        %v1141 = vpop.f32.mrf.mxu0
        %v1142 = vadd.f32 %v1109, %v1141
        %v1143 = vand.u32 %v477, 4294901760
        %1144 = vmatmul.f32.gmra.mxu0 %v1143
        %v1145 = vpop.f32.mrf.mxu0
        %v1146 = vadd.f32 %v1113, %v1145
        %v1147 = vand.u32 %v478, 4294901760
        %1148 = vmatmul.f32.gmra.mxu0 %v1147
        %v1149 = vpop.f32.mrf.mxu0
        %v1150 = vadd.f32 %v1117, %v1149
        %v1151 = vand.u32 %v479, 4294901760
        %1152 = vmatmul.f32.gmra.mxu0 %v1151
        %v1153 = vpop.f32.mrf.mxu0
        %v1154 = vadd.f32 %v1121, %v1153
        %1155 = vdwg.mxu0
        %v1156 = vld [vmem:[#allocation8] sm:$0xff]
        %v1157 = vld [vmem:[#allocation8 + $0x8] sm:$0xff]
        %v1158 = vld [vmem:[#allocation8 + $0x10] sm:$0xff]
        %v1159 = vld [vmem:[#allocation8 + $0x18] sm:$0xff]
        %1160 = vmatpush.msra.mxu0 %v474
        %1161 = vmatpush.msra.mxu0 %v472
        %1162 = vmatpush.msra.mxu0 %v470
        %1163 = vmatpush.msra.mxu0 %v468
        %1164 = vmatpush.msra.mxu0 %v466
        %1165 = vmatpush.msra.mxu0 %v464
        %1166 = vmatpush.msra.mxu0 %v462
        %1167 = vmatpush.msra.mxu0 %v460
        %1168 = vmatpush.msra.mxu0 %v458
        %1169 = vmatpush.msra.mxu0 %v456
        %1170 = vmatpush.msra.mxu0 %v454
        %1171 = vmatpush.msra.mxu0 %v452
        %1172 = vmatpush.msra.mxu0 %v450
        %1173 = vmatpush.msra.mxu0 %v448
        %1174 = vmatpush.msra.mxu0 %v446
        %1175 = vmatpush.msra.mxu0 %v444
        %v1176 = vand.u32 %v1156, 4294901760
        %v1177 = vsub.f32 %v1156, %v1176
        %v1178 = vand.u32 %v1177, 4294901760
        %v1179 = vsub.f32 %v1177, %v1178
        %v1180 = vand.u32 %v1179, 4294901760
        %1181 = vmatmul.f32.gmra.mxu0 %v1180
        %v1182 = vpop.f32.mrf.mxu0
        %v1183 = vadd.f32 0.0, %v1182
        %v1184 = vand.u32 %v1157, 4294901760
        %v1185 = vsub.f32 %v1157, %v1184
        %v1186 = vand.u32 %v1185, 4294901760
        %v1187 = vsub.f32 %v1185, %v1186
        %v1188 = vand.u32 %v1187, 4294901760
        %1189 = vmatmul.f32.gmra.mxu0 %v1188
        %v1190 = vpop.f32.mrf.mxu0
        %v1191 = vadd.f32 0.0, %v1190
        %v1192 = vand.u32 %v1158, 4294901760
        %v1193 = vsub.f32 %v1158, %v1192
        %v1194 = vand.u32 %v1193, 4294901760
        %v1195 = vsub.f32 %v1193, %v1194
        %v1196 = vand.u32 %v1195, 4294901760
        %1197 = vmatmul.f32.gmra.mxu0 %v1196
        %v1198 = vpop.f32.mrf.mxu0
        %v1199 = vadd.f32 0.0, %v1198
        %v1200 = vand.u32 %v1159, 4294901760
        %v1201 = vsub.f32 %v1159, %v1200
        %v1202 = vand.u32 %v1201, 4294901760
        %v1203 = vsub.f32 %v1201, %v1202
        %v1204 = vand.u32 %v1203, 4294901760
        %1205 = vmatmul.f32.gmra.mxu0 %v1204
        %v1206 = vpop.f32.mrf.mxu0
        %v1207 = vadd.f32 0.0, %v1206
        %1208 = vdwg.mxu0
        %v1209 = vsub.f32 %v474, %v474
        %v1210 = vand.u32 %v1209, 4294901760
        %v1211 = vsub.f32 %v1209, %v1210
        %v1212 = vand.u32 %v1211, 4294901760
        %1213 = vmatpush.msra.mxu0 %v1212
        %v1214 = vsub.f32 %v472, %v472
        %v1215 = vand.u32 %v1214, 4294901760
        %v1216 = vsub.f32 %v1214, %v1215
        %v1217 = vand.u32 %v1216, 4294901760
        %1218 = vmatpush.msra.mxu0 %v1217
        %v1219 = vsub.f32 %v470, %v470
        %v1220 = vand.u32 %v1219, 4294901760
        %v1221 = vsub.f32 %v1219, %v1220
        %v1222 = vand.u32 %v1221, 4294901760
        %1223 = vmatpush.msra.mxu0 %v1222
        %v1224 = vsub.f32 %v468, %v468
        %v1225 = vand.u32 %v1224, 4294901760
        %v1226 = vsub.f32 %v1224, %v1225
        %v1227 = vand.u32 %v1226, 4294901760
        %1228 = vmatpush.msra.mxu0 %v1227
        %v1229 = vsub.f32 %v466, %v466
        %v1230 = vand.u32 %v1229, 4294901760
        %v1231 = vsub.f32 %v1229, %v1230
        %v1232 = vand.u32 %v1231, 4294901760
        %1233 = vmatpush.msra.mxu0 %v1232
        %v1234 = vsub.f32 %v464, %v464
        %v1235 = vand.u32 %v1234, 4294901760
        %v1236 = vsub.f32 %v1234, %v1235
        %v1237 = vand.u32 %v1236, 4294901760
        %1238 = vmatpush.msra.mxu0 %v1237
        %v1239 = vsub.f32 %v462, %v462
        %v1240 = vand.u32 %v1239, 4294901760
        %v1241 = vsub.f32 %v1239, %v1240
        %v1242 = vand.u32 %v1241, 4294901760
        %1243 = vmatpush.msra.mxu0 %v1242
        %v1244 = vsub.f32 %v460, %v460
        %v1245 = vand.u32 %v1244, 4294901760
        %v1246 = vsub.f32 %v1244, %v1245
        %v1247 = vand.u32 %v1246, 4294901760
        %1248 = vmatpush.msra.mxu0 %v1247
        %v1249 = vsub.f32 %v458, %v458
        %v1250 = vand.u32 %v1249, 4294901760
        %v1251 = vsub.f32 %v1249, %v1250
        %v1252 = vand.u32 %v1251, 4294901760
        %1253 = vmatpush.msra.mxu0 %v1252
        %v1254 = vsub.f32 %v456, %v456
        %v1255 = vand.u32 %v1254, 4294901760
        %v1256 = vsub.f32 %v1254, %v1255
        %v1257 = vand.u32 %v1256, 4294901760
        %1258 = vmatpush.msra.mxu0 %v1257
        %v1259 = vsub.f32 %v454, %v454
        %v1260 = vand.u32 %v1259, 4294901760
        %v1261 = vsub.f32 %v1259, %v1260
        %v1262 = vand.u32 %v1261, 4294901760
        %1263 = vmatpush.msra.mxu0 %v1262
        %v1264 = vsub.f32 %v452, %v452
        %v1265 = vand.u32 %v1264, 4294901760
        %v1266 = vsub.f32 %v1264, %v1265
        %v1267 = vand.u32 %v1266, 4294901760
        %1268 = vmatpush.msra.mxu0 %v1267
        %v1269 = vsub.f32 %v450, %v450
        %v1270 = vand.u32 %v1269, 4294901760
        %v1271 = vsub.f32 %v1269, %v1270
        %v1272 = vand.u32 %v1271, 4294901760
        %1273 = vmatpush.msra.mxu0 %v1272
        %v1274 = vsub.f32 %v448, %v448
        %v1275 = vand.u32 %v1274, 4294901760
        %v1276 = vsub.f32 %v1274, %v1275
        %v1277 = vand.u32 %v1276, 4294901760
        %1278 = vmatpush.msra.mxu0 %v1277
        %v1279 = vsub.f32 %v446, %v446
        %v1280 = vand.u32 %v1279, 4294901760
        %v1281 = vsub.f32 %v1279, %v1280
        %v1282 = vand.u32 %v1281, 4294901760
        %1283 = vmatpush.msra.mxu0 %v1282
        %v1284 = vsub.f32 %v444, %v444
        %v1285 = vand.u32 %v1284, 4294901760
        %v1286 = vsub.f32 %v1284, %v1285
        %v1287 = vand.u32 %v1286, 4294901760
        %1288 = vmatpush.msra.mxu0 %v1287
        %v1289 = vand.u32 %v1156, 4294901760
        %1290 = vmatmul.f32.gmra.mxu0 %v1289
        %v1291 = vpop.f32.mrf.mxu0
        %v1292 = vadd.f32 %v1183, %v1291
        %v1293 = vand.u32 %v1157, 4294901760
        %1294 = vmatmul.f32.gmra.mxu0 %v1293
        %v1295 = vpop.f32.mrf.mxu0
        %v1296 = vadd.f32 %v1191, %v1295
        %v1297 = vand.u32 %v1158, 4294901760
        %1298 = vmatmul.f32.gmra.mxu0 %v1297
        %v1299 = vpop.f32.mrf.mxu0
        %v1300 = vadd.f32 %v1199, %v1299
        %v1301 = vand.u32 %v1159, 4294901760
        %1302 = vmatmul.f32.gmra.mxu0 %v1301
        %v1303 = vpop.f32.mrf.mxu0
        %v1304 = vadd.f32 %v1207, %v1303
        %1305 = vdwg.mxu0
        %v1306 = vsub.f32 %v474, %v474
        %1307 = vmatpush.msra.mxu0 %v1306
        %v1308 = vsub.f32 %v472, %v472
        %1309 = vmatpush.msra.mxu0 %v1308
        %v1310 = vsub.f32 %v470, %v470
        %1311 = vmatpush.msra.mxu0 %v1310
        %v1312 = vsub.f32 %v468, %v468
        %1313 = vmatpush.msra.mxu0 %v1312
        %v1314 = vsub.f32 %v466, %v466
        %1315 = vmatpush.msra.mxu0 %v1314
        %v1316 = vsub.f32 %v464, %v464
        %1317 = vmatpush.msra.mxu0 %v1316
        %v1318 = vsub.f32 %v462, %v462
        %1319 = vmatpush.msra.mxu0 %v1318
        %v1320 = vsub.f32 %v460, %v460
        %1321 = vmatpush.msra.mxu0 %v1320
        %v1322 = vsub.f32 %v458, %v458
        %1323 = vmatpush.msra.mxu0 %v1322
        %v1324 = vsub.f32 %v456, %v456
        %1325 = vmatpush.msra.mxu0 %v1324
        %v1326 = vsub.f32 %v454, %v454
        %1327 = vmatpush.msra.mxu0 %v1326
        %v1328 = vsub.f32 %v452, %v452
        %1329 = vmatpush.msra.mxu0 %v1328
        %v1330 = vsub.f32 %v450, %v450
        %1331 = vmatpush.msra.mxu0 %v1330
        %v1332 = vsub.f32 %v448, %v448
        %1333 = vmatpush.msra.mxu0 %v1332
        %v1334 = vsub.f32 %v446, %v446
        %1335 = vmatpush.msra.mxu0 %v1334
        %v1336 = vsub.f32 %v444, %v444
        %1337 = vmatpush.msra.mxu0 %v1336
        %v1338 = vand.u32 %v1156, 4294901760
        %v1339 = vsub.f32 %v1156, %v1338
        %1340 = vmatmul.f32.gmra.mxu0 %v1339
        %v1341 = vpop.f32.mrf.mxu0
        %v1342 = vadd.f32 %v1292, %v1341
        %v1343 = vand.u32 %v1157, 4294901760
        %v1344 = vsub.f32 %v1157, %v1343
        %1345 = vmatmul.f32.gmra.mxu0 %v1344
        %v1346 = vpop.f32.mrf.mxu0
        %v1347 = vadd.f32 %v1296, %v1346
        %v1348 = vand.u32 %v1158, 4294901760
        %v1349 = vsub.f32 %v1158, %v1348
        %1350 = vmatmul.f32.gmra.mxu0 %v1349
        %v1351 = vpop.f32.mrf.mxu0
        %v1352 = vadd.f32 %v1300, %v1351
        %v1353 = vand.u32 %v1159, 4294901760
        %v1354 = vsub.f32 %v1159, %v1353
        %1355 = vmatmul.f32.gmra.mxu0 %v1354
        %v1356 = vpop.f32.mrf.mxu0
        %v1357 = vadd.f32 %v1304, %v1356
        %1358 = vdwg.mxu0
        %1359 = vmatpush.msra.mxu0 %v474
        %1360 = vmatpush.msra.mxu0 %v472
        %1361 = vmatpush.msra.mxu0 %v470
        %1362 = vmatpush.msra.mxu0 %v468
        %1363 = vmatpush.msra.mxu0 %v466
        %1364 = vmatpush.msra.mxu0 %v464
        %1365 = vmatpush.msra.mxu0 %v462
        %1366 = vmatpush.msra.mxu0 %v460
        %1367 = vmatpush.msra.mxu0 %v458
        %1368 = vmatpush.msra.mxu0 %v456
        %1369 = vmatpush.msra.mxu0 %v454
        %1370 = vmatpush.msra.mxu0 %v452
        %1371 = vmatpush.msra.mxu0 %v450
        %1372 = vmatpush.msra.mxu0 %v448
        %1373 = vmatpush.msra.mxu0 %v446
        %1374 = vmatpush.msra.mxu0 %v444
        %v1375 = vand.u32 %v1156, 4294901760
        %v1376 = vsub.f32 %v1156, %v1375
        %v1377 = vand.u32 %v1376, 4294901760
        %1378 = vmatmul.f32.gmra.mxu0 %v1377
        %v1379 = vpop.f32.mrf.mxu0
        %v1380 = vadd.f32 %v1342, %v1379
        %v1381 = vand.u32 %v1157, 4294901760
        %v1382 = vsub.f32 %v1157, %v1381
        %v1383 = vand.u32 %v1382, 4294901760
        %1384 = vmatmul.f32.gmra.mxu0 %v1383
        %v1385 = vpop.f32.mrf.mxu0
        %v1386 = vadd.f32 %v1347, %v1385
        %v1387 = vand.u32 %v1158, 4294901760
        %v1388 = vsub.f32 %v1158, %v1387
        %v1389 = vand.u32 %v1388, 4294901760
        %1390 = vmatmul.f32.gmra.mxu0 %v1389
        %v1391 = vpop.f32.mrf.mxu0
        %v1392 = vadd.f32 %v1352, %v1391
        %v1393 = vand.u32 %v1159, 4294901760
        %v1394 = vsub.f32 %v1159, %v1393
        %v1395 = vand.u32 %v1394, 4294901760
        %1396 = vmatmul.f32.gmra.mxu0 %v1395
        %v1397 = vpop.f32.mrf.mxu0
        %v1398 = vadd.f32 %v1357, %v1397
        %1399 = vdwg.mxu0
        %v1400 = vsub.f32 %v474, %v474
        %v1401 = vand.u32 %v1400, 4294901760
        %1402 = vmatpush.msra.mxu0 %v1401
        %v1403 = vsub.f32 %v472, %v472
        %v1404 = vand.u32 %v1403, 4294901760
        %1405 = vmatpush.msra.mxu0 %v1404
        %v1406 = vsub.f32 %v470, %v470
        %v1407 = vand.u32 %v1406, 4294901760
        %1408 = vmatpush.msra.mxu0 %v1407
        %v1409 = vsub.f32 %v468, %v468
        %v1410 = vand.u32 %v1409, 4294901760
        %1411 = vmatpush.msra.mxu0 %v1410
        %v1412 = vsub.f32 %v466, %v466
        %v1413 = vand.u32 %v1412, 4294901760
        %1414 = vmatpush.msra.mxu0 %v1413
        %v1415 = vsub.f32 %v464, %v464
        %v1416 = vand.u32 %v1415, 4294901760
        %1417 = vmatpush.msra.mxu0 %v1416
        %v1418 = vsub.f32 %v462, %v462
        %v1419 = vand.u32 %v1418, 4294901760
        %1420 = vmatpush.msra.mxu0 %v1419
        %v1421 = vsub.f32 %v460, %v460
        %v1422 = vand.u32 %v1421, 4294901760
        %1423 = vmatpush.msra.mxu0 %v1422
        %v1424 = vsub.f32 %v458, %v458
        %v1425 = vand.u32 %v1424, 4294901760
        %1426 = vmatpush.msra.mxu0 %v1425
        %v1427 = vsub.f32 %v456, %v456
        %v1428 = vand.u32 %v1427, 4294901760
        %1429 = vmatpush.msra.mxu0 %v1428
        %v1430 = vsub.f32 %v454, %v454
        %v1431 = vand.u32 %v1430, 4294901760
        %1432 = vmatpush.msra.mxu0 %v1431
        %v1433 = vsub.f32 %v452, %v452
        %v1434 = vand.u32 %v1433, 4294901760
        %1435 = vmatpush.msra.mxu0 %v1434
        %v1436 = vsub.f32 %v450, %v450
        %v1437 = vand.u32 %v1436, 4294901760
        %1438 = vmatpush.msra.mxu0 %v1437
        %v1439 = vsub.f32 %v448, %v448
        %v1440 = vand.u32 %v1439, 4294901760
        %1441 = vmatpush.msra.mxu0 %v1440
        %v1442 = vsub.f32 %v446, %v446
        %v1443 = vand.u32 %v1442, 4294901760
        %1444 = vmatpush.msra.mxu0 %v1443
        %v1445 = vsub.f32 %v444, %v444
        %v1446 = vand.u32 %v1445, 4294901760
        %1447 = vmatpush.msra.mxu0 %v1446
        %v1448 = vand.u32 %v1156, 4294901760
        %1449 = vmatmul.f32.gmra.mxu0 %v1448
        %v1450 = vpop.f32.mrf.mxu0
        %v1451 = vadd.f32 %v1380, %v1450
        %v1452 = vand.u32 %v1157, 4294901760
        %1453 = vmatmul.f32.gmra.mxu0 %v1452
        %v1454 = vpop.f32.mrf.mxu0
        %v1455 = vadd.f32 %v1386, %v1454
        %v1456 = vand.u32 %v1158, 4294901760
        %1457 = vmatmul.f32.gmra.mxu0 %v1456
        %v1458 = vpop.f32.mrf.mxu0
        %v1459 = vadd.f32 %v1392, %v1458
        %v1460 = vand.u32 %v1159, 4294901760
        %1461 = vmatmul.f32.gmra.mxu0 %v1460
        %v1462 = vpop.f32.mrf.mxu0
        %v1463 = vadd.f32 %v1398, %v1462
        %1464 = vdwg.mxu0
        %1465 = vmatpush.msra.mxu0 %v474
        %1466 = vmatpush.msra.mxu0 %v472
        %1467 = vmatpush.msra.mxu0 %v470
        %1468 = vmatpush.msra.mxu0 %v468
        %1469 = vmatpush.msra.mxu0 %v466
        %1470 = vmatpush.msra.mxu0 %v464
        %1471 = vmatpush.msra.mxu0 %v462
        %1472 = vmatpush.msra.mxu0 %v460
        %1473 = vmatpush.msra.mxu0 %v458
        %1474 = vmatpush.msra.mxu0 %v456
        %1475 = vmatpush.msra.mxu0 %v454
        %1476 = vmatpush.msra.mxu0 %v452
        %1477 = vmatpush.msra.mxu0 %v450
        %1478 = vmatpush.msra.mxu0 %v448
        %1479 = vmatpush.msra.mxu0 %v446
        %1480 = vmatpush.msra.mxu0 %v444
        %v1481 = vand.u32 %v1156, 4294901760
        %1482 = vmatmul.f32.gmra.mxu0 %v1481
        %v1483 = vpop.f32.mrf.mxu0
        %v1484 = vadd.f32 %v1451, %v1483
        %v1485 = vand.u32 %v1157, 4294901760
        %1486 = vmatmul.f32.gmra.mxu0 %v1485
        %v1487 = vpop.f32.mrf.mxu0
        %v1488 = vadd.f32 %v1455, %v1487
        %v1489 = vand.u32 %v1158, 4294901760
        %1490 = vmatmul.f32.gmra.mxu0 %v1489
        %v1491 = vpop.f32.mrf.mxu0
        %v1492 = vadd.f32 %v1459, %v1491
        %v1493 = vand.u32 %v1159, 4294901760
        %1494 = vmatmul.f32.gmra.mxu0 %v1493
        %v1495 = vpop.f32.mrf.mxu0
        %v1496 = vadd.f32 %v1463, %v1495
        %1497 = vdwg.mxu0
        %1498 = vmatpush.msra.mxu0 %v475
        %1499 = vmatpush.msra.mxu0 %v473
        %1500 = vmatpush.msra.mxu0 %v471
        %1501 = vmatpush.msra.mxu0 %v469
        %1502 = vmatpush.msra.mxu0 %v467
        %1503 = vmatpush.msra.mxu0 %v465
        %1504 = vmatpush.msra.mxu0 %v463
        %1505 = vmatpush.msra.mxu0 %v461
        %1506 = vmatpush.msra.mxu0 %v459
        %1507 = vmatpush.msra.mxu0 %v457
        %1508 = vmatpush.msra.mxu0 %v455
        %1509 = vmatpush.msra.mxu0 %v453
        %1510 = vmatpush.msra.mxu0 %v451
        %1511 = vmatpush.msra.mxu0 %v449
        %1512 = vmatpush.msra.mxu0 %v447
        %1513 = vmatpush.msra.mxu0 %v445
        %v1514 = vand.u32 %v1156, 4294901760
        %v1515 = vsub.f32 %v1156, %v1514
        %v1516 = vand.u32 %v1515, 4294901760
        %v1517 = vsub.f32 %v1515, %v1516
        %v1518 = vand.u32 %v1517, 4294901760
        %1519 = vmatmul.f32.gmra.mxu0 %v1518
        %v1520 = vpop.f32.mrf.mxu0
        %v1521 = vadd.f32 0.0, %v1520
        %v1522 = vand.u32 %v1157, 4294901760
        %v1523 = vsub.f32 %v1157, %v1522
        %v1524 = vand.u32 %v1523, 4294901760
        %v1525 = vsub.f32 %v1523, %v1524
        %v1526 = vand.u32 %v1525, 4294901760
        %1527 = vmatmul.f32.gmra.mxu0 %v1526
        %v1528 = vpop.f32.mrf.mxu0
        %v1529 = vadd.f32 0.0, %v1528
        %v1530 = vand.u32 %v1158, 4294901760
        %v1531 = vsub.f32 %v1158, %v1530
        %v1532 = vand.u32 %v1531, 4294901760
        %v1533 = vsub.f32 %v1531, %v1532
        %v1534 = vand.u32 %v1533, 4294901760
        %1535 = vmatmul.f32.gmra.mxu0 %v1534
        %v1536 = vpop.f32.mrf.mxu0
        %v1537 = vadd.f32 0.0, %v1536
        %v1538 = vand.u32 %v1159, 4294901760
        %v1539 = vsub.f32 %v1159, %v1538
        %v1540 = vand.u32 %v1539, 4294901760
        %v1541 = vsub.f32 %v1539, %v1540
        %v1542 = vand.u32 %v1541, 4294901760
        %1543 = vmatmul.f32.gmra.mxu0 %v1542
        %v1544 = vpop.f32.mrf.mxu0
        %v1545 = vadd.f32 0.0, %v1544
        %1546 = vdwg.mxu0
        %v1547 = vsub.f32 %v475, %v475
        %v1548 = vand.u32 %v1547, 4294901760
        %v1549 = vsub.f32 %v1547, %v1548
        %v1550 = vand.u32 %v1549, 4294901760
        %1551 = vmatpush.msra.mxu0 %v1550
        %v1552 = vsub.f32 %v473, %v473
        %v1553 = vand.u32 %v1552, 4294901760
        %v1554 = vsub.f32 %v1552, %v1553
        %v1555 = vand.u32 %v1554, 4294901760
        %1556 = vmatpush.msra.mxu0 %v1555
        %v1557 = vsub.f32 %v471, %v471
        %v1558 = vand.u32 %v1557, 4294901760
        %v1559 = vsub.f32 %v1557, %v1558
        %v1560 = vand.u32 %v1559, 4294901760
        %1561 = vmatpush.msra.mxu0 %v1560
        %v1562 = vsub.f32 %v469, %v469
        %v1563 = vand.u32 %v1562, 4294901760
        %v1564 = vsub.f32 %v1562, %v1563
        %v1565 = vand.u32 %v1564, 4294901760
        %1566 = vmatpush.msra.mxu0 %v1565
        %v1567 = vsub.f32 %v467, %v467
        %v1568 = vand.u32 %v1567, 4294901760
        %v1569 = vsub.f32 %v1567, %v1568
        %v1570 = vand.u32 %v1569, 4294901760
        %1571 = vmatpush.msra.mxu0 %v1570
        %v1572 = vsub.f32 %v465, %v465
        %v1573 = vand.u32 %v1572, 4294901760
        %v1574 = vsub.f32 %v1572, %v1573
        %v1575 = vand.u32 %v1574, 4294901760
        %1576 = vmatpush.msra.mxu0 %v1575
        %v1577 = vsub.f32 %v463, %v463
        %v1578 = vand.u32 %v1577, 4294901760
        %v1579 = vsub.f32 %v1577, %v1578
        %v1580 = vand.u32 %v1579, 4294901760
        %1581 = vmatpush.msra.mxu0 %v1580
        %v1582 = vsub.f32 %v461, %v461
        %v1583 = vand.u32 %v1582, 4294901760
        %v1584 = vsub.f32 %v1582, %v1583
        %v1585 = vand.u32 %v1584, 4294901760
        %1586 = vmatpush.msra.mxu0 %v1585
        %v1587 = vsub.f32 %v459, %v459
        %v1588 = vand.u32 %v1587, 4294901760
        %v1589 = vsub.f32 %v1587, %v1588
        %v1590 = vand.u32 %v1589, 4294901760
        %1591 = vmatpush.msra.mxu0 %v1590
        %v1592 = vsub.f32 %v457, %v457
        %v1593 = vand.u32 %v1592, 4294901760
        %v1594 = vsub.f32 %v1592, %v1593
        %v1595 = vand.u32 %v1594, 4294901760
        %1596 = vmatpush.msra.mxu0 %v1595
        %v1597 = vsub.f32 %v455, %v455
        %v1598 = vand.u32 %v1597, 4294901760
        %v1599 = vsub.f32 %v1597, %v1598
        %v1600 = vand.u32 %v1599, 4294901760
        %1601 = vmatpush.msra.mxu0 %v1600
        %v1602 = vsub.f32 %v453, %v453
        %v1603 = vand.u32 %v1602, 4294901760
        %v1604 = vsub.f32 %v1602, %v1603
        %v1605 = vand.u32 %v1604, 4294901760
        %1606 = vmatpush.msra.mxu0 %v1605
        %v1607 = vsub.f32 %v451, %v451
        %v1608 = vand.u32 %v1607, 4294901760
        %v1609 = vsub.f32 %v1607, %v1608
        %v1610 = vand.u32 %v1609, 4294901760
        %1611 = vmatpush.msra.mxu0 %v1610
        %v1612 = vsub.f32 %v449, %v449
        %v1613 = vand.u32 %v1612, 4294901760
        %v1614 = vsub.f32 %v1612, %v1613
        %v1615 = vand.u32 %v1614, 4294901760
        %1616 = vmatpush.msra.mxu0 %v1615
        %v1617 = vsub.f32 %v447, %v447
        %v1618 = vand.u32 %v1617, 4294901760
        %v1619 = vsub.f32 %v1617, %v1618
        %v1620 = vand.u32 %v1619, 4294901760
        %1621 = vmatpush.msra.mxu0 %v1620
        %v1622 = vsub.f32 %v445, %v445
        %v1623 = vand.u32 %v1622, 4294901760
        %v1624 = vsub.f32 %v1622, %v1623
        %v1625 = vand.u32 %v1624, 4294901760
        %1626 = vmatpush.msra.mxu0 %v1625
        %v1627 = vand.u32 %v1156, 4294901760
        %1628 = vmatmul.f32.gmra.mxu0 %v1627
        %v1629 = vpop.f32.mrf.mxu0
        %v1630 = vadd.f32 %v1521, %v1629
        %v1631 = vand.u32 %v1157, 4294901760
        %1632 = vmatmul.f32.gmra.mxu0 %v1631
        %v1633 = vpop.f32.mrf.mxu0
        %v1634 = vadd.f32 %v1529, %v1633
        %v1635 = vand.u32 %v1158, 4294901760
        %1636 = vmatmul.f32.gmra.mxu0 %v1635
        %v1637 = vpop.f32.mrf.mxu0
        %v1638 = vadd.f32 %v1537, %v1637
        %v1639 = vand.u32 %v1159, 4294901760
        %1640 = vmatmul.f32.gmra.mxu0 %v1639
        %v1641 = vpop.f32.mrf.mxu0
        %v1642 = vadd.f32 %v1545, %v1641
        %1643 = vdwg.mxu0
        %v1644 = vsub.f32 %v475, %v475
        %1645 = vmatpush.msra.mxu0 %v1644
        %v1646 = vsub.f32 %v473, %v473
        %1647 = vmatpush.msra.mxu0 %v1646
        %v1648 = vsub.f32 %v471, %v471
        %1649 = vmatpush.msra.mxu0 %v1648
        %v1650 = vsub.f32 %v469, %v469
        %1651 = vmatpush.msra.mxu0 %v1650
        %v1652 = vsub.f32 %v467, %v467
        %1653 = vmatpush.msra.mxu0 %v1652
        %v1654 = vsub.f32 %v465, %v465
        %1655 = vmatpush.msra.mxu0 %v1654
        %v1656 = vsub.f32 %v463, %v463
        %1657 = vmatpush.msra.mxu0 %v1656
        %v1658 = vsub.f32 %v461, %v461
        %1659 = vmatpush.msra.mxu0 %v1658
        %v1660 = vsub.f32 %v459, %v459
        %1661 = vmatpush.msra.mxu0 %v1660
        %v1662 = vsub.f32 %v457, %v457
        %1663 = vmatpush.msra.mxu0 %v1662
        %v1664 = vsub.f32 %v455, %v455
        %1665 = vmatpush.msra.mxu0 %v1664
        %v1666 = vsub.f32 %v453, %v453
        %1667 = vmatpush.msra.mxu0 %v1666
        %v1668 = vsub.f32 %v451, %v451
        %1669 = vmatpush.msra.mxu0 %v1668
        %v1670 = vsub.f32 %v449, %v449
        %1671 = vmatpush.msra.mxu0 %v1670
        %v1672 = vsub.f32 %v447, %v447
        %1673 = vmatpush.msra.mxu0 %v1672
        %v1674 = vsub.f32 %v445, %v445
        %1675 = vmatpush.msra.mxu0 %v1674
        %v1676 = vand.u32 %v1156, 4294901760
        %v1677 = vsub.f32 %v1156, %v1676
        %1678 = vmatmul.f32.gmra.mxu0 %v1677
        %v1679 = vpop.f32.mrf.mxu0
        %v1680 = vadd.f32 %v1630, %v1679
        %v1681 = vand.u32 %v1157, 4294901760
        %v1682 = vsub.f32 %v1157, %v1681
        %1683 = vmatmul.f32.gmra.mxu0 %v1682
        %v1684 = vpop.f32.mrf.mxu0
        %v1685 = vadd.f32 %v1634, %v1684
        %v1686 = vand.u32 %v1158, 4294901760
        %v1687 = vsub.f32 %v1158, %v1686
        %1688 = vmatmul.f32.gmra.mxu0 %v1687
        %v1689 = vpop.f32.mrf.mxu0
        %v1690 = vadd.f32 %v1638, %v1689
        %v1691 = vand.u32 %v1159, 4294901760
        %v1692 = vsub.f32 %v1159, %v1691
        %1693 = vmatmul.f32.gmra.mxu0 %v1692
        %v1694 = vpop.f32.mrf.mxu0
        %v1695 = vadd.f32 %v1642, %v1694
        %1696 = vdwg.mxu0
        %1697 = vmatpush.msra.mxu0 %v475
        %1698 = vmatpush.msra.mxu0 %v473
        %1699 = vmatpush.msra.mxu0 %v471
        %1700 = vmatpush.msra.mxu0 %v469
        %1701 = vmatpush.msra.mxu0 %v467
        %1702 = vmatpush.msra.mxu0 %v465
        %1703 = vmatpush.msra.mxu0 %v463
        %1704 = vmatpush.msra.mxu0 %v461
        %1705 = vmatpush.msra.mxu0 %v459
        %1706 = vmatpush.msra.mxu0 %v457
        %1707 = vmatpush.msra.mxu0 %v455
        %1708 = vmatpush.msra.mxu0 %v453
        %1709 = vmatpush.msra.mxu0 %v451
        %1710 = vmatpush.msra.mxu0 %v449
        %1711 = vmatpush.msra.mxu0 %v447
        %1712 = vmatpush.msra.mxu0 %v445
        %v1713 = vand.u32 %v1156, 4294901760
        %v1714 = vsub.f32 %v1156, %v1713
        %v1715 = vand.u32 %v1714, 4294901760
        %1716 = vmatmul.f32.gmra.mxu0 %v1715
        %v1717 = vpop.f32.mrf.mxu0
        %v1718 = vadd.f32 %v1680, %v1717
        %v1719 = vand.u32 %v1157, 4294901760
        %v1720 = vsub.f32 %v1157, %v1719
        %v1721 = vand.u32 %v1720, 4294901760
        %1722 = vmatmul.f32.gmra.mxu0 %v1721
        %v1723 = vpop.f32.mrf.mxu0
        %v1724 = vadd.f32 %v1685, %v1723
        %v1725 = vand.u32 %v1158, 4294901760
        %v1726 = vsub.f32 %v1158, %v1725
        %v1727 = vand.u32 %v1726, 4294901760
        %1728 = vmatmul.f32.gmra.mxu0 %v1727
        %v1729 = vpop.f32.mrf.mxu0
        %v1730 = vadd.f32 %v1690, %v1729
        %v1731 = vand.u32 %v1159, 4294901760
        %v1732 = vsub.f32 %v1159, %v1731
        %v1733 = vand.u32 %v1732, 4294901760
        %1734 = vmatmul.f32.gmra.mxu0 %v1733
        %v1735 = vpop.f32.mrf.mxu0
        %v1736 = vadd.f32 %v1695, %v1735
        %1737 = vdwg.mxu0
        %v1738 = vsub.f32 %v475, %v475
        %v1739 = vand.u32 %v1738, 4294901760
        %1740 = vmatpush.msra.mxu0 %v1739
        %v1741 = vsub.f32 %v473, %v473
        %v1742 = vand.u32 %v1741, 4294901760
        %1743 = vmatpush.msra.mxu0 %v1742
        %v1744 = vsub.f32 %v471, %v471
        %v1745 = vand.u32 %v1744, 4294901760
        %1746 = vmatpush.msra.mxu0 %v1745
        %v1747 = vsub.f32 %v469, %v469
        %v1748 = vand.u32 %v1747, 4294901760
        %1749 = vmatpush.msra.mxu0 %v1748
        %v1750 = vsub.f32 %v467, %v467
        %v1751 = vand.u32 %v1750, 4294901760
        %1752 = vmatpush.msra.mxu0 %v1751
        %v1753 = vsub.f32 %v465, %v465
        %v1754 = vand.u32 %v1753, 4294901760
        %1755 = vmatpush.msra.mxu0 %v1754
        %v1756 = vsub.f32 %v463, %v463
        %v1757 = vand.u32 %v1756, 4294901760
        %1758 = vmatpush.msra.mxu0 %v1757
        %v1759 = vsub.f32 %v461, %v461
        %v1760 = vand.u32 %v1759, 4294901760
        %1761 = vmatpush.msra.mxu0 %v1760
        %v1762 = vsub.f32 %v459, %v459
        %v1763 = vand.u32 %v1762, 4294901760
        %1764 = vmatpush.msra.mxu0 %v1763
        %v1765 = vsub.f32 %v457, %v457
        %v1766 = vand.u32 %v1765, 4294901760
        %1767 = vmatpush.msra.mxu0 %v1766
        %v1768 = vsub.f32 %v455, %v455
        %v1769 = vand.u32 %v1768, 4294901760
        %1770 = vmatpush.msra.mxu0 %v1769
        %v1771 = vsub.f32 %v453, %v453
        %v1772 = vand.u32 %v1771, 4294901760
        %1773 = vmatpush.msra.mxu0 %v1772
        %v1774 = vsub.f32 %v451, %v451
        %v1775 = vand.u32 %v1774, 4294901760
        %1776 = vmatpush.msra.mxu0 %v1775
        %v1777 = vsub.f32 %v449, %v449
        %v1778 = vand.u32 %v1777, 4294901760
        %1779 = vmatpush.msra.mxu0 %v1778
        %v1780 = vsub.f32 %v447, %v447
        %v1781 = vand.u32 %v1780, 4294901760
        %1782 = vmatpush.msra.mxu0 %v1781
        %v1783 = vsub.f32 %v445, %v445
        %v1784 = vand.u32 %v1783, 4294901760
        %1785 = vmatpush.msra.mxu0 %v1784
        %v1786 = vand.u32 %v1156, 4294901760
        %1787 = vmatmul.f32.gmra.mxu0 %v1786
        %v1788 = vpop.f32.mrf.mxu0
        %v1789 = vadd.f32 %v1718, %v1788
        %v1790 = vand.u32 %v1157, 4294901760
        %1791 = vmatmul.f32.gmra.mxu0 %v1790
        %v1792 = vpop.f32.mrf.mxu0
        %v1793 = vadd.f32 %v1724, %v1792
        %v1794 = vand.u32 %v1158, 4294901760
        %1795 = vmatmul.f32.gmra.mxu0 %v1794
        %v1796 = vpop.f32.mrf.mxu0
        %v1797 = vadd.f32 %v1730, %v1796
        %v1798 = vand.u32 %v1159, 4294901760
        %1799 = vmatmul.f32.gmra.mxu0 %v1798
        %v1800 = vpop.f32.mrf.mxu0
        %v1801 = vadd.f32 %v1736, %v1800
        %1802 = vdwg.mxu0
        %1803 = vmatpush.msra.mxu0 %v475
        %1804 = vmatpush.msra.mxu0 %v473
        %1805 = vmatpush.msra.mxu0 %v471
        %1806 = vmatpush.msra.mxu0 %v469
        %1807 = vmatpush.msra.mxu0 %v467
        %1808 = vmatpush.msra.mxu0 %v465
        %1809 = vmatpush.msra.mxu0 %v463
        %1810 = vmatpush.msra.mxu0 %v461
        %1811 = vmatpush.msra.mxu0 %v459
        %1812 = vmatpush.msra.mxu0 %v457
        %1813 = vmatpush.msra.mxu0 %v455
        %1814 = vmatpush.msra.mxu0 %v453
        %1815 = vmatpush.msra.mxu0 %v451
        %1816 = vmatpush.msra.mxu0 %v449
        %1817 = vmatpush.msra.mxu0 %v447
        %1818 = vmatpush.msra.mxu0 %v445
        %v1819 = vand.u32 %v1156, 4294901760
        %1820 = vmatmul.f32.gmra.mxu0 %v1819
        %v1821 = vpop.f32.mrf.mxu0
        %v1822 = vadd.f32 %v1789, %v1821
        %v1823 = vand.u32 %v1157, 4294901760
        %1824 = vmatmul.f32.gmra.mxu0 %v1823
        %v1825 = vpop.f32.mrf.mxu0
        %v1826 = vadd.f32 %v1793, %v1825
        %v1827 = vand.u32 %v1158, 4294901760
        %1828 = vmatmul.f32.gmra.mxu0 %v1827
        %v1829 = vpop.f32.mrf.mxu0
        %v1830 = vadd.f32 %v1797, %v1829
        %v1831 = vand.u32 %v1159, 4294901760
        %1832 = vmatmul.f32.gmra.mxu0 %v1831
        %v1833 = vpop.f32.mrf.mxu0
        %v1834 = vadd.f32 %v1801, %v1833
        %1835 = vdwg.mxu0
        %v1836 = vmul.f32 %v804, %v1484
        %v1837 = vmul.f32 %v1142, %v1822
        %v1838 = vmul.f32 %v808, %v1488
        %v1839 = vmul.f32 %v1146, %v1826
        %v1840 = vmul.f32 %v812, %v1492
        %v1841 = vmul.f32 %v1150, %v1830
        %v1842 = vmul.f32 %v816, %v1496
        %v1843 = vmul.f32 %v1154, %v1834
        %v1844 = vld [vmem:[%s4] sm:$0xff]
        %v1845 = vld [vmem:[%s4 + $0x8] sm:$0xff]
        %v1846 = vld [vmem:[%s4 + $0x10] sm:$0xff]
        %v1847 = vld [vmem:[%s4 + $0x18] sm:$0xff]
        %1849 = vset.pattern.permute.xlu0 0
        %1850 = vperm.xlu0 %1849, %v1844
        %v1851 = vpop.permute.xlu0 %1850
        %1854 = vset.pattern.permute.xlu0 0
        %1855 = vperm.xlu0 %1854, %v1845
        %v1856 = vpop.permute.xlu0 %1855
        %1859 = vset.pattern.permute.xlu0 0
        %1860 = vperm.xlu0 %1859, %v1846
        %v1861 = vpop.permute.xlu0 %1860
        %1864 = vset.pattern.permute.xlu0 0
        %1865 = vperm.xlu0 %1864, %v1847
        %v1866 = vpop.permute.xlu0 %1865
        %v1868 = vmul.f32 %v1836, %v1851
        %v1869 = vmul.f32 %v1837, %v1851
        %v1870 = vmul.f32 %v1838, %v1856
        %v1871 = vmul.f32 %v1839, %v1856
        %v1872 = vmul.f32 %v1840, %v1861
        %v1873 = vmul.f32 %v1841, %v1861
        %v1874 = vmul.f32 %v1842, %v1866
        %v1875 = vmul.f32 %v1843, %v1866
        %v1876 = vadd.f32 %v1868, %v1870
        %v1877 = vadd.f32 %v1876, %v1872
        %v1878 = vadd.f32 %v1877, %v1874
        %v1879 = vrot.slane %v1878, 4
        %v1880 = vadd.f32 %v1878, %v1879
        %v1881 = vrot.slane %v1880, 2
        %v1882 = vadd.f32 %v1880, %v1881
        %v1883 = vrot.slane %v1882, 1
        %v1884 = vadd.f32 %v1882, %v1883
        %v1885 = vadd.f32 %v1869, %v1871
        %v1886 = vadd.f32 %v1885, %v1873
        %v1887 = vadd.f32 %v1886, %v1875
        %v1888 = vrot.slane %v1887, 4
        %v1889 = vadd.f32 %v1887, %v1888
        %v1890 = vrot.slane %v1889, 2
        %v1891 = vadd.f32 %v1889, %v1890
        %v1892 = vrot.slane %v1891, 1
        %v1893 = vadd.f32 %v1891, %v1892
        %s1894 = sld [smem:[#allocation2]]
        %v1895 = vstv %s1894
        %v1896 = vadd.f32 %v1884, %v1895
        %v1897 = vadd.f32 %v1893, %v1895
        %v1898 = vxor.u32 %v1896, 2147483648
        %v1899 = vxor.u32 %v1897, 2147483648
        %v1900 = vmul.f32 %v1898, 1.442695
        %v1901 = vpow.pop %v1900
        %v1902 = vmul.f32 %v1899, 1.442695
        %v1903 = vpow.pop %v1902
        %v1904 = vadd.f32 %v1901, 1.0
        %v1905 = vadd.f32 %v1903, 1.0
        %v1906 = vrcp.pop %v1904
        %v1907 = vmul.f32 %v1904, %v1906
        %v1908 = vsub.f32 1.0, %v1907
        %v1909 = vmul.f32 %v1906, %v1908
        %v1910 = vadd.f32 %v1906, %v1909
        %vm1911 = vweird.f32 %v1904
        %vm1912 = vweird.f32 %v1906
        %vm1913 = vmor %vm1911, %vm1912
        %v1914 = vsel %vm1913, %v1906, %v1910
        %v1915 = vand.u32 2147483647, %v1904
        %vm1916 = vcmp.eq.f32.partialorder %v1915, 8.507059e+37
        %v1917 = vand.u32 %v1904, 2147483648
        %v1918 = vor.u32 1.1754944e-38, %v1917
        %v1919 = vsel %vm1916, %v1918, %v1914
        %v1920 = vmul.f32 1.0, %v1919
        %v1921 = vrcp.pop %v1905
        %v1922 = vmul.f32 %v1905, %v1921
        %v1923 = vsub.f32 1.0, %v1922
        %v1924 = vmul.f32 %v1921, %v1923
        %v1925 = vadd.f32 %v1921, %v1924
        %vm1926 = vweird.f32 %v1905
        %vm1927 = vweird.f32 %v1921
        %vm1928 = vmor %vm1926, %vm1927
        %v1929 = vsel %vm1928, %v1921, %v1925
        %v1930 = vand.u32 2147483647, %v1905
        %vm1931 = vcmp.eq.f32.partialorder %v1930, 8.507059e+37
        %v1932 = vand.u32 %v1905, 2147483648
        %v1933 = vor.u32 1.1754944e-38, %v1932
        %v1934 = vsel %vm1931, %v1933, %v1929
        %v1935 = vmul.f32 1.0, %v1934
        %v1938 = vrot.slane %v1935, 7
        %vm1939 = vcmask 1040384
        %v1940 = vsel %vm1939, %v1920, %v1938
        %v1942 = vlaneseq
        %vm1943 = vcmp.ge.s32.totalorder %v1942, 0
        %vm1944 = vcmp.lt.s32.totalorder %v1942, 256
        %vm1945 = vmand %vm1943, %vm1944
        %1946 = vst.msk [vmem:[%s324] sm:$0x3] %vm1945, %v1940
        %s1947 = sand.u32 %s171, 1
        %s1948 = scalar_lea.sflag [#allocation5], %s1947
        %s1949 = sand.u32 %s171, 1
        %s1950 = smul.addr %s1949, 2
        %s1951 = scalar_lea.vmem [#allocation9], %s1950
        // Predicated region
        $region57: #{tpu_custom_call.1} parent=43 // pred_check
          %p1952 = pneg %p181
        $region58: #{tpu_custom_call.1} parent=43 // pred_check_branch
          %1954 = sbr.rel (%p1952) target = $region60
        $region59: #{tpu_custom_call.1} parent=43 // pred_region
          %1956 = vsyncadd %s1948, 0
          %s1957 = smul.addr %s27, 2
          %s1958 = scalar_lea.hbm %s6, %s1957
          %s1960 = sshll.u32 %s1951, 4
          %s1961 = int_to_ptr.vmem [resolvable:$true] %s1960
          %s1962 = sshll.u32 %s1958, 4
          %s1963 = int_to_ptr.hbm [resolvable:$true] %s1962
          %1965 = dma.vmem_to_hbm [thread:$0]  %s1961, 32, %s1963, %s1948
        $region60: #{tpu_custom_call.1} parent=43 // pred_fallthru
          _
      $region44: #{tpu_custom_call.1} parent=5 // pred_fallthru
        _
      %p1966 = scmp.le.s32.totalorder 2, %s22
      // Predicated region
      $region61: #{tpu_custom_call.1} parent=5 // pred_check
        %p1967 = pneg %p1966
      $region62: #{tpu_custom_call.1} parent=5 // pred_check_branch
        %1969 = sbr.rel (%p1967) target = $region64
      $region63: #{tpu_custom_call.1} parent=5 // pred_region
        %s1970 = ssub.s32 %s22, 2
        // Predicated region
        $region65: #{tpu_custom_call.1} parent=63 // pred_check
          %p1971 = pneg %p187
        $region66: #{tpu_custom_call.1} parent=63 // pred_check_branch
          %1973 = sbr.rel (%p1971) target = $region68
        $region67: #{tpu_custom_call.1} parent=63 // pred_region
          %s1974 = sand.u32 %s172, 1
          %s1975 = scalar_lea.sflag [#allocation5], %s1974
          %s1976 = sand.u32 %s172, 1
          %s1977 = smul.addr %s1976, 2
          %s1978 = scalar_lea.vmem [#allocation9], %s1977
          %1980 = dma.done %s1975, 32
        $region68: #{tpu_custom_call.1} parent=63 // pred_fallthru
          _
      $region64: #{tpu_custom_call.1} parent=5 // pred_fallthru
        _
    $region6: #{tpu_custom_call.1} parent=1 // loop_footer
      %s26 = sadd.s32 1, %s22
    $region7: #{tpu_custom_call.1} parent=1 // loop_footer_branch
      %21 = sbr.rel target = $region3
    $region8: #{tpu_custom_call.1} parent=1 // loop_exit
      _
    %1981 = vsyncpa [#allocation4], 1
    %s1982 = scalar_lea.sflag [#allocation4], 1
    %1983 = vsyncpa %s1982, 1
    %1984 = vsyncpa [#allocation7], 1
    %s1985 = scalar_lea.sflag [#allocation7], 1
    %1986 = vsyncpa %s1985, 1
    %1987 = vsyncpa [#allocation5], 1
    %s1988 = scalar_lea.sflag [#allocation5], 1
    %1989 = vsyncpa %s1988, 1

</llo_original>
